<compile_context>
chip_gen: v7x
topology: tpu7x:2x2x1
jax: 0.10.0
libtpu: 0.0.40
codegen_flags: <defaults>
</compile_context>

<pallas_src>
import functools

import jax
import jax.numpy as jnp
from jax.experimental import pallas as pl
from jax.experimental.pallas import tpu as pltpu


# ---------------------------------------------------------------------------
# Fused kernel: 1x1 conv (wc @ x) + bias + ReLU + global avg pool + MLP.
# ---------------------------------------------------------------------------
def _pose_kernel(x_ref, wc_ref, bc_ref, w1_ref, b1_ref, w2_ref, b2_ref,
                 o_ref, acc_ref, *, inv_hw, hw, thw, needs_mask):
    t = pl.program_id(1)

    x = x_ref[0].astype(jnp.bfloat16)                                   # (C, THW)
    # 1x1 conv == channel matmul; torch conv weight (256, C) used as-is.
    h = jnp.dot(wc_ref[...], x, preferred_element_type=jnp.float32)     # (256, THW)
    h = jnp.maximum(h + bc_ref[...], 0.0)                               # bias + ReLU

    if needs_mask:
        # Remainder tile: zero out columns past the true spatial extent.
        valid = hw - t * thw
        col = jax.lax.broadcasted_iota(jnp.int32, h.shape, 1)
        h = jnp.where(col < valid, h, 0.0)

    part = jnp.sum(h, axis=1, keepdims=True)                            # (256, 1)

    @pl.when(t == 0)
    def _init():
        acc_ref[...] = part

    @pl.when(t != 0)
    def _accumulate():
        acc_ref[...] += part

    @pl.when(t == pl.num_programs(1) - 1)
    def _finalize():
        # Fused MLP epilogue in torch-native (out, in) layouts: column matvecs
        # keep the MXU feed native (no in-kernel weight transpose).
        pooled = acc_ref[...] * inv_hw                                   # (256, 1)
        h1 = jnp.dot(w1_ref[...], pooled, preferred_element_type=jnp.float32)
        h1 = jnp.maximum(h1 + b1_ref[...], 0.0)                          # (64, 1)
        out = jnp.dot(w2_ref[...], h1, preferred_element_type=jnp.float32)
        o_ref[0] = out + b2_ref[...]                                     # (6, 1), 0.01 folded


def _max_hw_tile():
    """Generation-dependent cap on the spatial tile (columns of the x block)."""
    try:
        kind = jax.devices()[0].device_kind.lower()
    except Exception:
        return 2048
    if "v6" in kind or "v7" in kind or "7x" in kind:
        return 4096          # fits v6e/v7x scoped VMEM with an explicit budget
    return 2048              # v5e default scoped VMEM is 16 MiB


def _pick_hw_tile(hw, cap):
    """Largest VMEM-safe spatial tile; full extent if small, else 128-multiples."""
    if hw <= cap:
        return hw            # single full-extent block (no (8,128) constraint)
    for t in (4096, 2048, 1024, 512, 256, 128):
        if t <= cap and hw % t == 0:
            return t         # exact tiling, no remainder masking needed
    return cap               # cdiv grid + masked remainder tile


def prepare_params(params):
    """One-time parameter prep: torch-native layouts in, kernel-ready out."""
    return {
        "wc": params["wc"].astype(jnp.bfloat16),                         # (256, C)
        "bc": params["bc"].reshape(-1, 1).astype(jnp.float32),           # (256, 1)
        "w1": params["w1"].astype(jnp.float32),                          # (64, 256)
        "b1": params["b1"].reshape(-1, 1).astype(jnp.float32),           # (64, 1)
        "w2": (params["w2"] * 0.01).astype(jnp.float32),                 # (6, 64), 0.01 folded
        "b2": (params["b2"] * 0.01).reshape(-1, 1).astype(jnp.float32),  # (6, 1)
    }


def pose_decoder_forward(feature, prep):
    """feature: (B, C, H, W) float32 NCHW, exactly like the PyTorch module."""
    B, C, H, W = feature.shape
    HW = H * W
    x = feature.reshape(B, C, HW)        # free reshape, no NCHW->NHWC transpose

    cap = _max_hw_tile()
    thw = _pick_hw_tile(HW, cap)
    n_t = pl.cdiv(HW, thw)
    needs_mask = (HW % thw) != 0

    # Explicit scoped-VMEM budget: double-buffered x block + weights + margin.
    vmem_need = 2 * (C * thw * 4) + 2 * (256 * C * 2) + (6 << 20)
    vmem_limit = int(min(max(vmem_need, 16 << 20), 30 << 20))

    # TODO(synk): when B < number of TensorCores (v7x), split the HW reduction
    # across cores with per-core partial sums combined in the wrapper.
    out = pl.pallas_call(
        functools.partial(_pose_kernel, inv_hw=1.0 / HW, hw=HW, thw=thw,
                          needs_mask=needs_mask),
        out_shape=jax.ShapeDtypeStruct((B, 6, 1), jnp.float32),
        grid_spec=pltpu.PrefetchScalarGridSpec(
            num_scalar_prefetch=0,
            grid=(B, n_t),
            in_specs=[
                pl.BlockSpec((1, C, thw), lambda b, t: (b, 0, t)),   # x
                pl.BlockSpec((256, C), lambda b, t: (0, 0)),         # conv weight
                pl.BlockSpec((256, 1), lambda b, t: (0, 0)),         # conv bias
                pl.BlockSpec((64, 256), lambda b, t: (0, 0)),        # linear1 weight
                pl.BlockSpec((64, 1), lambda b, t: (0, 0)),          # linear1 bias
                pl.BlockSpec((6, 64), lambda b, t: (0, 0)),          # linear2 weight
                pl.BlockSpec((6, 1), lambda b, t: (0, 0)),           # linear2 bias
            ],
            out_specs=pl.BlockSpec((1, 6, 1), lambda b, t: (b, 0, 0)),
            scratch_shapes=[pltpu.VMEM((256, 1), jnp.float32)],      # pooled accumulator
        ),
        compiler_params=pltpu.CompilerParams(
            dimension_semantics=("parallel", "arbitrary"),
            vmem_limit_bytes=vmem_limit),
    )(x, prep["wc"], prep["bc"], prep["w1"], prep["b1"], prep["w2"], prep["b2"])

    out = out.reshape(-1, 1, 1, 6)       # matches 0.01 * out.view(-1, 1, 1, 6)
    return out[..., :3], out[..., 3:]


def init_params(key, last_chn=512):
    """Deterministic synthetic parameters in native PyTorch layouts."""
    k = jax.random.split(key, 6)
    s = 0.02
    return {
        # Conv2d(last_chn, 256, 1).weight (256, last_chn, 1, 1) squeezed.
        "wc": s * jax.random.normal(k[0], (256, last_chn), jnp.float32),
        "bc": s * jax.random.normal(k[1], (256,), jnp.float32),
        # Linear(256, 64).weight is (64, 256) = (out, in).
        "w1": s * jax.random.normal(k[2], (64, 256), jnp.float32),
        "b1": s * jax.random.normal(k[3], (64,), jnp.float32),
        # Linear(64, 6).weight is (6, 64).
        "w2": s * jax.random.normal(k[4], (6, 64), jnp.float32),
        "b2": s * jax.random.normal(k[5], (6,), jnp.float32),
    }


def pose_decoder_ref(feature, params):
    """Pure-JAX f32 reference (same math as the PyTorch forward)."""
    B, C, H, W = feature.shape
    x = feature.reshape(B, C, H * W)                                 # (B, C, HW)
    h = jnp.einsum("oc,bcp->bop", params["wc"], x) + params["bc"][None, :, None]
    h = jnp.maximum(h, 0.0)
    pooled = jnp.mean(h, axis=2)                                     # (B, 256)
    h1 = jnp.maximum(pooled @ params["w1"].T + params["b1"], 0.0)
    out = 0.01 * (h1 @ params["w2"].T + params["b2"])
    out = out.reshape(-1, 1, 1, 6)
    return out[..., :3], out[..., 3:]


if __name__ == "__main__":
    key = jax.random.PRNGKey(0)
    kx, kp = jax.random.split(key)

    # conv_squeeze requires 512 input channels (resnet18/34 backbone).
    B, C, H, W = 2, 512, 4, 4
    feature = jax.random.normal(kx, (B, C, H, W), jnp.float32)
    params = init_params(kp, last_chn=C)
    prep = prepare_params(params)

    angle, translation = pose_decoder_forward(feature, prep)
    angle, translation = jax.block_until_ready((angle, translation))

    angle_ref, trans_ref = pose_decoder_ref(feature, params)
    assert angle.shape == (B, 1, 1, 3) and translation.shape == (B, 1, 1, 3)
    # Tolerance accounts for bf16 conv operands (f32 accumulation) vs f32 ref.
    assert jnp.allclose(angle, angle_ref, atol=1e-4, rtol=2e-2)
    assert jnp.allclose(translation, trans_ref, atol=1e-4, rtol=2e-2)

    print("KERNEL_OK")
</pallas_src>

<mosaic_0001>
module attributes {stable_mosaic.version = 11 : i64} {
  func.func @_pose_kernel(%arg0: i32, %arg1: i32, %arg2: memref<1x512x16xf32, #tpu.memory_space<vmem>>, %arg3: memref<256x512xbf16, #tpu.memory_space<vmem>>, %arg4: memref<256x1xf32, #tpu.memory_space<vmem>>, %arg5: memref<64x256xf32, #tpu.memory_space<vmem>>, %arg6: memref<64x1xf32, #tpu.memory_space<vmem>>, %arg7: memref<6x64xf32, #tpu.memory_space<vmem>>, %arg8: memref<6x1xf32, #tpu.memory_space<vmem>>, %arg9: memref<1x6x1xf32, #tpu.memory_space<vmem>>, %arg10: memref<256x1xf32, #tpu.memory_space<vmem>>) attributes {dimension_semantics = [#tpu.dimension_semantics<parallel>, #tpu.dimension_semantics<arbitrary>], iteration_bounds = array<i64: 2, 1>, scalar_prefetch = 0 : i64, scratch_operands = 1 : i64, tpu.core_type = #tpu.core_type<tc>, window_params = [{transform_indices = @transform_0, window_bounds = array<i64: 1, 512, 16>}, {pipeline_mode = #tpu.pipeline_mode<synchronous>, transform_indices = @transform_1, window_bounds = array<i64: 256, 512>}, {pipeline_mode = #tpu.pipeline_mode<synchronous>, transform_indices = @transform_2, window_bounds = array<i64: 256, 1>}, {pipeline_mode = #tpu.pipeline_mode<synchronous>, transform_indices = @transform_3, window_bounds = array<i64: 64, 256>}, {pipeline_mode = #tpu.pipeline_mode<synchronous>, transform_indices = @transform_4, window_bounds = array<i64: 64, 1>}, {pipeline_mode = #tpu.pipeline_mode<synchronous>, transform_indices = @transform_5, window_bounds = array<i64: 6, 64>}, {pipeline_mode = #tpu.pipeline_mode<synchronous>, transform_indices = @transform_6, window_bounds = array<i64: 6, 1>}, {transform_indices = @transform_7, window_bounds = array<i64: 1, 6, 1>}]} {
    %c0 = arith.constant 0 : index
    %c0_0 = arith.constant 0 : index
    %c0_1 = arith.constant 0 : index
    %0 = vector.load %arg2[%c0, %c0_0, %c0_1] : memref<1x512x16xf32, #tpu.memory_space<vmem>>, vector<1x512x16xf32>
    %1 = vector.shape_cast %0 : vector<1x512x16xf32> to vector<512x16xf32>
    %2 = arith.truncf %1 : vector<512x16xf32> to vector<512x16xbf16>
    %c0_2 = arith.constant 0 : index
    %c0_3 = arith.constant 0 : index
    %3 = vector.load %arg3[%c0_2, %c0_3] : memref<256x512xbf16, #tpu.memory_space<vmem>>, vector<256x512xbf16>
    %cst = arith.constant dense<0.000000e+00> : vector<256x16xf32>
    %4 = tpu.matmul %3, %2, %cst {dimension_numbers = #tpu.dot_dimension_numbers<[1], [0], [0], [1], [0, 0, 1, 1], [], []>} : vector<256x512xbf16>, vector<512x16xbf16>, vector<256x16xf32> -> vector<256x16xf32>
    %c0_4 = arith.constant 0 : index
    %c0_5 = arith.constant 0 : index
    %5 = vector.load %arg4[%c0_4, %c0_5] : memref<256x1xf32, #tpu.memory_space<vmem>>, vector<256x1xf32>
    %6 = vector.broadcast %5 : vector<256x1xf32> to vector<256x16xf32>
    %7 = arith.addf %4, %6 : vector<256x16xf32>
    %cst_6 = arith.constant 0.000000e+00 : f32
    %8 = vector.broadcast %cst_6 : f32 to vector<256x16xf32>
    %9 = arith.maximumf %7, %8 : vector<256x16xf32>
    %cst_7 = arith.constant dense<0.000000e+00> : vector<256xf32>
    %10 = vector.multi_reduction <add>, %9, %cst_7 [1] : vector<256x16xf32> to vector<256xf32>
    %11 = vector.shape_cast %10 : vector<256xf32> to vector<256x1xf32>
    %c0_i32 = arith.constant 0 : i32
    %12 = arith.cmpi eq, %arg1, %c0_i32 : i32
    %13 = arith.extui %12 : i1 to i32
    %c0_i32_8 = arith.constant 0 : i32
    %14 = arith.cmpi ne, %13, %c0_i32_8 : i32
    scf.if %14 {
      %c0_13 = arith.constant 0 : index
      %c0_14 = arith.constant 0 : index
      %21 = vector.load %arg10[%c0_13, %c0_14] : memref<256x1xf32, #tpu.memory_space<vmem>>, vector<256x1xf32>
      tpu.vector_store %arg10[%c0_13, %c0_14], %11 {strides = array<i32>} : memref<256x1xf32, #tpu.memory_space<vmem>>, vector<256x1xf32>,
    } else {
    }
    %c0_i32_9 = arith.constant 0 : i32
    %15 = arith.cmpi ne, %arg1, %c0_i32_9 : i32
    %16 = arith.extui %15 : i1 to i32
    %c0_i32_10 = arith.constant 0 : i32
    %17 = arith.cmpi ne, %16, %c0_i32_10 : i32
    scf.if %17 {
      %c0_13 = arith.constant 0 : index
      %c0_14 = arith.constant 0 : index
      %21 = vector.load %arg10[%c0_13, %c0_14] : memref<256x1xf32, #tpu.memory_space<vmem>>, vector<256x1xf32>
      %22 = arith.addf %21, %11 : vector<256x1xf32>
      %c0_15 = arith.constant 0 : index
      %c0_16 = arith.constant 0 : index
      %23 = vector.load %arg10[%c0_15, %c0_16] : memref<256x1xf32, #tpu.memory_space<vmem>>, vector<256x1xf32>
      tpu.vector_store %arg10[%c0_15, %c0_16], %22 {strides = array<i32>} : memref<256x1xf32, #tpu.memory_space<vmem>>, vector<256x1xf32>,
    } else {
    }
    %c0_i32_11 = arith.constant 0 : i32
    %18 = arith.cmpi eq, %arg1, %c0_i32_11 : i32
    %19 = arith.extui %18 : i1 to i32
    %c0_i32_12 = arith.constant 0 : i32
    %20 = arith.cmpi ne, %19, %c0_i32_12 : i32
    scf.if %20 {
      %c0_13 = arith.constant 0 : index
      %c0_14 = arith.constant 0 : index
      %21 = vector.load %arg10[%c0_13, %c0_14] : memref<256x1xf32, #tpu.memory_space<vmem>>, vector<256x1xf32>
      %cst_15 = arith.constant 6.250000e-02 : f32
      %22 = vector.broadcast %cst_15 : f32 to vector<256x1xf32>
      %23 = arith.mulf %21, %22 : vector<256x1xf32>
      %c0_16 = arith.constant 0 : index
      %c0_17 = arith.constant 0 : index
      %24 = vector.load %arg5[%c0_16, %c0_17] : memref<64x256xf32, #tpu.memory_space<vmem>>, vector<64x256xf32>
      %cst_18 = arith.constant dense<0.000000e+00> : vector<64x1xf32>
      %25 = tpu.matmul %24, %23, %cst_18 {dimension_numbers = #tpu.dot_dimension_numbers<[1], [0], [0], [1], [0, 0, 1, 1], [], []>} : vector<64x256xf32>, vector<256x1xf32>, vector<64x1xf32> -> vector<64x1xf32>
      %c0_19 = arith.constant 0 : index
      %c0_20 = arith.constant 0 : index
      %26 = vector.load %arg6[%c0_19, %c0_20] : memref<64x1xf32, #tpu.memory_space<vmem>>, vector<64x1xf32>
      %27 = arith.addf %25, %26 : vector<64x1xf32>
      %cst_21 = arith.constant 0.000000e+00 : f32
      %28 = vector.broadcast %cst_21 : f32 to vector<64x1xf32>
      %29 = arith.maximumf %27, %28 : vector<64x1xf32>
      %c0_22 = arith.constant 0 : index
      %c0_23 = arith.constant 0 : index
      %30 = vector.load %arg7[%c0_22, %c0_23] : memref<6x64xf32, #tpu.memory_space<vmem>>, vector<6x64xf32>
      %cst_24 = arith.constant dense<0.000000e+00> : vector<6x1xf32>
      %31 = tpu.matmul %30, %29, %cst_24 {dimension_numbers = #tpu.dot_dimension_numbers<[1], [0], [0], [1], [0, 0, 1, 1], [], []>} : vector<6x64xf32>, vector<64x1xf32>, vector<6x1xf32> -> vector<6x1xf32>
      %c0_25 = arith.constant 0 : index
      %c0_26 = arith.constant 0 : index
      %32 = vector.load %arg8[%c0_25, %c0_26] : memref<6x1xf32, #tpu.memory_space<vmem>>, vector<6x1xf32>
      %33 = arith.addf %31, %32 : vector<6x1xf32>
      %c0_27 = arith.constant 0 : index
      %c0_28 = arith.constant 0 : index
      %c0_29 = arith.constant 0 : index
      %34 = vector.load %arg9[%c0_27, %c0_28, %c0_29] : memref<1x6x1xf32, #tpu.memory_space<vmem>>, vector<1x6x1xf32>
      %35 = vector.shape_cast %34 : vector<1x6x1xf32> to vector<6x1xf32>
      %36 = vector.shape_cast %33 : vector<6x1xf32> to vector<1x6x1xf32>
      tpu.vector_store %arg9[%c0_27, %c0_28, %c0_29], %36 {strides = array<i32>} : memref<1x6x1xf32, #tpu.memory_space<vmem>>, vector<1x6x1xf32>,
    } else {
    }
    return
  }
  func.func @transform_0(%arg0: i32, %arg1: i32) -> (i32, i32, i32) {
    %c0_i32 = arith.constant 0 : i32
    %c0_i32_0 = arith.constant 0 : i32
    return %arg0, %c0_i32, %arg1 : i32, i32, i32
  }
  func.func @transform_1(%arg0: i32, %arg1: i32) -> (i32, i32) {
    %c0_i32 = arith.constant 0 : i32
    %c0_i32_0 = arith.constant 0 : i32
    %c0_i32_1 = arith.constant 0 : i32
    return %c0_i32, %c0_i32_0 : i32, i32
  }
  func.func @transform_2(%arg0: i32, %arg1: i32) -> (i32, i32) {
    %c0_i32 = arith.constant 0 : i32
    %c0_i32_0 = arith.constant 0 : i32
    %c0_i32_1 = arith.constant 0 : i32
    return %c0_i32, %c0_i32_0 : i32, i32
  }
  func.func @transform_3(%arg0: i32, %arg1: i32) -> (i32, i32) {
    %c0_i32 = arith.constant 0 : i32
    %c0_i32_0 = arith.constant 0 : i32
    %c0_i32_1 = arith.constant 0 : i32
    return %c0_i32, %c0_i32_0 : i32, i32
  }
  func.func @transform_4(%arg0: i32, %arg1: i32) -> (i32, i32) {
    %c0_i32 = arith.constant 0 : i32
    %c0_i32_0 = arith.constant 0 : i32
    %c0_i32_1 = arith.constant 0 : i32
    return %c0_i32, %c0_i32_0 : i32, i32
  }
  func.func @transform_5(%arg0: i32, %arg1: i32) -> (i32, i32) {
    %c0_i32 = arith.constant 0 : i32
    %c0_i32_0 = arith.constant 0 : i32
    %c0_i32_1 = arith.constant 0 : i32
    return %c0_i32, %c0_i32_0 : i32, i32
  }
  func.func @transform_6(%arg0: i32, %arg1: i32) -> (i32, i32) {
    %c0_i32 = arith.constant 0 : i32
    %c0_i32_0 = arith.constant 0 : i32
    %c0_i32_1 = arith.constant 0 : i32
    return %c0_i32, %c0_i32_0 : i32, i32
  }
  func.func @transform_7(%arg0: i32, %arg1: i32) -> (i32, i32, i32) {
    %c0_i32 = arith.constant 0 : i32
    %c0_i32_0 = arith.constant 0 : i32
    %c0_i32_1 = arith.constant 0 : i32
    return %arg0, %c0_i32, %c0_i32_0 : i32, i32, i32
  }
}

</mosaic_0001>

<llo_original>
// kernel: tpu_custom_call.1
$region0: #{tpu_custom_call.1}
  #allocation0 [shape = 'u32[]', space=smem, size = 0x4, offset = 0x4, fixed_abs, tag = 'smem constant byte address 0x4 - core index']
  #allocation1 [shape = 'u32[144,128]{1,0:T(1,128)}', space=vmem, size = 0x12000, scoped, tag = 'internal scratch']
  #allocation2 [shape = 'f32[256,1]{1,0:T(8,128)}', space=vmem, size = 0x20000, scoped, tag = 'scratch operand']
  %s0 = inlined_call_operand.vmem [shape: f32[2,512,16], index: 0, kind: input, shape index: {}]
  %s1 = inlined_call_operand.vmem [shape: bf16[256,512], index: 1, kind: input, shape index: {}]
  %s2 = inlined_call_operand.vmem [shape: f32[256,1], index: 2, kind: input, shape index: {}]
  %s3 = inlined_call_operand.vmem [shape: f32[64,256], index: 3, kind: input, shape index: {}]
  %s4 = inlined_call_operand.vmem [shape: f32[64,1], index: 4, kind: input, shape index: {}]
  %s5 = inlined_call_operand.vmem [shape: f32[6,64], index: 5, kind: input, shape index: {}]
  %s6 = inlined_call_operand.vmem [shape: f32[6,1], index: 6, kind: input, shape index: {}]
  %s7 = inlined_call_operand.vmem [shape: f32[2,6,1], index: 7, kind: output, shape index: {}]
  %s8 = sld [smem:[#allocation0]]
  $region73: #{tpu_custom_call.1} parent=0
    _
  %s10 = ssub.s32 1, %s8
  %s11 = scalar_select 0, %s10, %s8
  loop: start=0, step=1, limit=4
  $region2: #{tpu_custom_call.1} parent=0 // loop_pre_header
    _
  $region3: #{tpu_custom_call.1} parent=0 // loop_header
    %s13 = sphi 0, %s17
    %p14 = scmp.ge.s32.totalorder %s13, 4
    %s20 = sphi 0, %s32
    %s21 = sphi 0, %s28
    %s22 = sphi 0, %s20
    %s23 = sphi 0, %s21
    %s24 = sphi 0, %s22
    %s25 = sphi 0, %s23
    %s37 = sphi 0, %s39
    %s40 = sphi 0, %s37
    %s41 = sphi 0, %s40
    %s57 = sphi 0, %s41
    %s61 = sphi 0, %s61
    %s63 = sphi 0, %s61
    %s64 = sphi 0, %s63
    %s78 = sphi 0, %s64
    %s82 = sphi 0, %s82
    %s84 = sphi 0, %s82
    %s85 = sphi 0, %s84
    %s99 = sphi 0, %s85
    %s103 = sphi 0, %s103
    %s105 = sphi 0, %s103
    %s106 = sphi 0, %s105
    %s120 = sphi 0, %s106
    %s124 = sphi 0, %s124
    %s126 = sphi 0, %s124
    %s127 = sphi 0, %s126
    %s141 = sphi 0, %s127
    %s145 = sphi 0, %s145
    %s147 = sphi 0, %s145
    %s148 = sphi 0, %s147
    %s162 = sphi 0, %s148
    %s166 = sphi 0, %s166
    %s168 = sphi 0, %s166
    %s169 = sphi 0, %s168
    %s183 = sphi 0, %s169
    %s189 = sphi 0, %s191
    %s192 = sphi 0, %s189
    %s193 = sphi 0, %s192
    %s209 = sphi 0, %s193
  $region4: #{tpu_custom_call.1} parent=0 // loop_header_branch
    %16 = sbr.rel (%p14) target = $region8
  $region5: #{tpu_custom_call.1} parent=0 // loop_body
    %s18 = ssub.s32 %s13, 1
    %s19 = ssub.s32 %s13, 2
    %s26 = sadd.s32 1, %s21
    %p27 = scmp.ge.s32.totalorder %s26, 1
    %s28 = scalar_select %p27, 0, %s26
    %s29 = sadd.s32 1, %s20
    %s30 = scalar_select %p27, %s29, %s20
    %p31 = scmp.ge.s32.totalorder %s30, 2
    %s32 = scalar_select %p31, 0, %s30
    %s33 = ssub.s32 %s20, %s32
    %s34 = ssub.s32 %s21, %s28
    %s35 = sor.u32 %s33, %s34
    %p36 = scmp.eq.s32.totalorder %s35, 0
    %s38 = sadd.s32 %s37, 1
    %s39 = scalar_select %p36, %s37, %s38
    %p42 = pneg %p36
    %p43 = scmp.eq.s32.totalorder %s13, 1
    %p44 = por %p42, %p43
    %p45 = scmp.ne.s32.totalorder %s37, %s40
    %p46 = scmp.eq.s32.totalorder %s13, 0
    %p47 = por %p45, %p46
    %p48 = scmp.ne.s32.totalorder %s37, %s40
    %p49 = scmp.eq.s32.totalorder %s18, 1
    %p50 = por %p48, %p49
    %p51 = scmp.ne.s32.totalorder %s40, %s41
    %p52 = scmp.eq.s32.totalorder %s18, 0
    %p53 = por %p51, %p52
    %p54 = scmp.ne.s32.totalorder %s40, %s41
    %p55 = scmp.eq.s32.totalorder %s19, 1
    %p56 = por %p54, %p55
    %p58 = scmp.ne.s32.totalorder %s41, %s57
    %p59 = scmp.eq.s32.totalorder %s19, 0
    %p60 = por %p58, %p59
    %s62 = sadd.s32 %s61, 1
    %p65 = scmp.eq.s32.totalorder %s13, 1
    %p66 = scmp.ne.s32.totalorder %s61, %s63
    %p67 = scmp.eq.s32.totalorder %s13, 0
    %p68 = por %p66, %p67
    %p69 = scmp.ne.s32.totalorder %s61, %s63
    %p70 = scmp.eq.s32.totalorder %s18, 1
    %p71 = por %p69, %p70
    %p72 = scmp.ne.s32.totalorder %s63, %s64
    %p73 = scmp.eq.s32.totalorder %s18, 0
    %p74 = por %p72, %p73
    %p75 = scmp.ne.s32.totalorder %s63, %s64
    %p76 = scmp.eq.s32.totalorder %s19, 1
    %p77 = por %p75, %p76
    %p79 = scmp.ne.s32.totalorder %s64, %s78
    %p80 = scmp.eq.s32.totalorder %s19, 0
    %p81 = por %p79, %p80
    %s83 = sadd.s32 %s82, 1
    %p86 = scmp.eq.s32.totalorder %s13, 1
    %p87 = scmp.ne.s32.totalorder %s82, %s84
    %p88 = scmp.eq.s32.totalorder %s13, 0
    %p89 = por %p87, %p88
    %p90 = scmp.ne.s32.totalorder %s82, %s84
    %p91 = scmp.eq.s32.totalorder %s18, 1
    %p92 = por %p90, %p91
    %p93 = scmp.ne.s32.totalorder %s84, %s85
    %p94 = scmp.eq.s32.totalorder %s18, 0
    %p95 = por %p93, %p94
    %p96 = scmp.ne.s32.totalorder %s84, %s85
    %p97 = scmp.eq.s32.totalorder %s19, 1
    %p98 = por %p96, %p97
    %p100 = scmp.ne.s32.totalorder %s85, %s99
    %p101 = scmp.eq.s32.totalorder %s19, 0
    %p102 = por %p100, %p101
    %s104 = sadd.s32 %s103, 1
    %p107 = scmp.eq.s32.totalorder %s13, 1
    %p108 = scmp.ne.s32.totalorder %s103, %s105
    %p109 = scmp.eq.s32.totalorder %s13, 0
    %p110 = por %p108, %p109
    %p111 = scmp.ne.s32.totalorder %s103, %s105
    %p112 = scmp.eq.s32.totalorder %s18, 1
    %p113 = por %p111, %p112
    %p114 = scmp.ne.s32.totalorder %s105, %s106
    %p115 = scmp.eq.s32.totalorder %s18, 0
    %p116 = por %p114, %p115
    %p117 = scmp.ne.s32.totalorder %s105, %s106
    %p118 = scmp.eq.s32.totalorder %s19, 1
    %p119 = por %p117, %p118
    %p121 = scmp.ne.s32.totalorder %s106, %s120
    %p122 = scmp.eq.s32.totalorder %s19, 0
    %p123 = por %p121, %p122
    %s125 = sadd.s32 %s124, 1
    %p128 = scmp.eq.s32.totalorder %s13, 1
    %p129 = scmp.ne.s32.totalorder %s124, %s126
    %p130 = scmp.eq.s32.totalorder %s13, 0
    %p131 = por %p129, %p130
    %p132 = scmp.ne.s32.totalorder %s124, %s126
    %p133 = scmp.eq.s32.totalorder %s18, 1
    %p134 = por %p132, %p133
    %p135 = scmp.ne.s32.totalorder %s126, %s127
    %p136 = scmp.eq.s32.totalorder %s18, 0
    %p137 = por %p135, %p136
    %p138 = scmp.ne.s32.totalorder %s126, %s127
    %p139 = scmp.eq.s32.totalorder %s19, 1
    %p140 = por %p138, %p139
    %p142 = scmp.ne.s32.totalorder %s127, %s141
    %p143 = scmp.eq.s32.totalorder %s19, 0
    %p144 = por %p142, %p143
    %s146 = sadd.s32 %s145, 1
    %p149 = scmp.eq.s32.totalorder %s13, 1
    %p150 = scmp.ne.s32.totalorder %s145, %s147
    %p151 = scmp.eq.s32.totalorder %s13, 0
    %p152 = por %p150, %p151
    %p153 = scmp.ne.s32.totalorder %s145, %s147
    %p154 = scmp.eq.s32.totalorder %s18, 1
    %p155 = por %p153, %p154
    %p156 = scmp.ne.s32.totalorder %s147, %s148
    %p157 = scmp.eq.s32.totalorder %s18, 0
    %p158 = por %p156, %p157
    %p159 = scmp.ne.s32.totalorder %s147, %s148
    %p160 = scmp.eq.s32.totalorder %s19, 1
    %p161 = por %p159, %p160
    %p163 = scmp.ne.s32.totalorder %s148, %s162
    %p164 = scmp.eq.s32.totalorder %s19, 0
    %p165 = por %p163, %p164
    %s167 = sadd.s32 %s166, 1
    %p170 = scmp.eq.s32.totalorder %s13, 1
    %p171 = scmp.ne.s32.totalorder %s166, %s168
    %p172 = scmp.eq.s32.totalorder %s13, 0
    %p173 = por %p171, %p172
    %p174 = scmp.ne.s32.totalorder %s166, %s168
    %p175 = scmp.eq.s32.totalorder %s18, 1
    %p176 = por %p174, %p175
    %p177 = scmp.ne.s32.totalorder %s168, %s169
    %p178 = scmp.eq.s32.totalorder %s18, 0
    %p179 = por %p177, %p178
    %p180 = scmp.ne.s32.totalorder %s168, %s169
    %p181 = scmp.eq.s32.totalorder %s19, 1
    %p182 = por %p180, %p181
    %p184 = scmp.ne.s32.totalorder %s169, %s183
    %p185 = scmp.eq.s32.totalorder %s19, 0
    %p186 = por %p184, %p185
    %s187 = ssub.s32 %s20, %s32
    %p188 = scmp.eq.s32.totalorder %s187, 0
    %s190 = sadd.s32 %s189, 1
    %s191 = scalar_select %p188, %s189, %s190
    %p194 = pneg %p188
    %p195 = scmp.eq.s32.totalorder %s13, 1
    %p196 = por %p194, %p195
    %p197 = scmp.ne.s32.totalorder %s189, %s192
    %p198 = scmp.eq.s32.totalorder %s13, 0
    %p199 = por %p197, %p198
    %p200 = scmp.ne.s32.totalorder %s189, %s192
    %p201 = scmp.eq.s32.totalorder %s18, 1
    %p202 = por %p200, %p201
    %p203 = scmp.ne.s32.totalorder %s192, %s193
    %p204 = scmp.eq.s32.totalorder %s18, 0
    %p205 = por %p203, %p204
    %p206 = scmp.ne.s32.totalorder %s192, %s193
    %p207 = scmp.eq.s32.totalorder %s19, 1
    %p208 = por %p206, %p207
    %p210 = scmp.ne.s32.totalorder %s193, %s209
    %p211 = scmp.eq.s32.totalorder %s19, 0
    %p212 = por %p210, %p211
    %p213 = scmp.le.s32.totalorder 1, %s13
    %p214 = scmp.lt.s32.totalorder %s13, 3
    %p215 = pnand %p213, %p214
    %p216 = pneg %p215
    // Predicated region
    $region9: #{tpu_custom_call.1} parent=5 // pred_check
      _
    $region10: #{tpu_custom_call.1} parent=5 // pred_check_branch
      %218 = sbr.rel (%p215) target = $region12
    $region11: #{tpu_custom_call.1} parent=5 // pred_region
      %s219 = ssub.s32 %s13, 1
      // Predicated region
      $region13: #{tpu_custom_call.1} parent=11 // pred_check
        %p220 = pneg %p74
      $region14: #{tpu_custom_call.1} parent=11 // pred_check_branch
        %222 = sbr.rel (%p220) target = $region16
      $region15: #{tpu_custom_call.1} parent=11 // pred_region
        _
      $region16: #{tpu_custom_call.1} parent=11 // pred_fallthru
        _
      // Predicated region
      $region17: #{tpu_custom_call.1} parent=11 // pred_check
        %p223 = pneg %p95
      $region18: #{tpu_custom_call.1} parent=11 // pred_check_branch
        %225 = sbr.rel (%p223) target = $region20
      $region19: #{tpu_custom_call.1} parent=11 // pred_region
        _
      $region20: #{tpu_custom_call.1} parent=11 // pred_fallthru
        _
      // Predicated region
      $region21: #{tpu_custom_call.1} parent=11 // pred_check
        %p226 = pneg %p116
      $region22: #{tpu_custom_call.1} parent=11 // pred_check_branch
        %228 = sbr.rel (%p226) target = $region24
      $region23: #{tpu_custom_call.1} parent=11 // pred_region
        _
      $region24: #{tpu_custom_call.1} parent=11 // pred_fallthru
        _
      // Predicated region
      $region25: #{tpu_custom_call.1} parent=11 // pred_check
        %p229 = pneg %p137
      $region26: #{tpu_custom_call.1} parent=11 // pred_check_branch
        %231 = sbr.rel (%p229) target = $region28
      $region27: #{tpu_custom_call.1} parent=11 // pred_region
        _
      $region28: #{tpu_custom_call.1} parent=11 // pred_fallthru
        _
      // Predicated region
      $region29: #{tpu_custom_call.1} parent=11 // pred_check
        %p232 = pneg %p158
      $region30: #{tpu_custom_call.1} parent=11 // pred_check_branch
        %234 = sbr.rel (%p232) target = $region32
      $region31: #{tpu_custom_call.1} parent=11 // pred_region
        _
      $region32: #{tpu_custom_call.1} parent=11 // pred_fallthru
        _
      // Predicated region
      $region33: #{tpu_custom_call.1} parent=11 // pred_check
        %p235 = pneg %p179
      $region34: #{tpu_custom_call.1} parent=11 // pred_check_branch
        %237 = sbr.rel (%p235) target = $region36
      $region35: #{tpu_custom_call.1} parent=11 // pred_region
        _
      $region36: #{tpu_custom_call.1} parent=11 // pred_fallthru
        _
    $region12: #{tpu_custom_call.1} parent=5 // pred_fallthru
      _
    %p238 = scmp.lt.s32.totalorder %s13, 2
    // Predicated region
    $region37: #{tpu_custom_call.1} parent=5 // pred_check
      %p239 = pneg %p238
    $region38: #{tpu_custom_call.1} parent=5 // pred_check_branch
      %241 = sbr.rel (%p239) target = $region40
    $region39: #{tpu_custom_call.1} parent=5 // pred_region
      // Predicated region
      $region41: #{tpu_custom_call.1} parent=39 // pred_check
        %p242 = pneg %p47
      $region42: #{tpu_custom_call.1} parent=39 // pred_check_branch
        %244 = sbr.rel (%p242) target = $region44
      $region43: #{tpu_custom_call.1} parent=39 // pred_region
        %p245 = scmp.lt.s32.totalorder %s20, 1
        %s246 = scalar_select %p245, %s20, 1
        %p247 = scmp.lt.s32.totalorder %s21, 0
        %s248 = scalar_select %p247, %s21, 0
        %s249 = smul.addr %s246, 64
        %s250 = sadd.s32 %s248, %s249
        %s251 = smul.addr %s250, 8
        %s252 = scalar_lea.vmem %s0, %s251
      $region44: #{tpu_custom_call.1} parent=39 // pred_fallthru
        _
    $region40: #{tpu_custom_call.1} parent=5 // pred_fallthru
      _
    %p253 = scmp.le.s32.totalorder 1, %s13
    %p254 = scmp.lt.s32.totalorder %s13, 3
    %p255 = pnand %p253, %p254
    %p256 = pneg %p255
    // Predicated region
    $region45: #{tpu_custom_call.1} parent=5 // pred_check
      _
    $region46: #{tpu_custom_call.1} parent=5 // pred_check_branch
      %258 = sbr.rel (%p255) target = $region48
    $region47: #{tpu_custom_call.1} parent=5 // pred_region
      %s259 = ssub.s32 %s13, 1
      %p260 = scmp.lt.s32.totalorder %s22, 1
      %s261 = scalar_select %p260, %s22, 1
      %p262 = scmp.lt.s32.totalorder %s23, 0
      %s263 = scalar_select %p262, %s23, 0
      %s264 = smul.addr %s261, 64
      %s265 = sadd.s32 %s263, %s264
      %s266 = smul.addr %s265, 8
      %s267 = scalar_lea.vmem %s0, %s266
      %p268 = pneg %p53
      %p269 = pneg %p50
      %p270 = pneg %p74
      %p271 = pneg %p71
      %p272 = pneg %p95
      %p273 = pneg %p92
      %p274 = pneg %p116
      %p275 = pneg %p113
      %p276 = pneg %p137
      %p277 = pneg %p134
      %p278 = pneg %p158
      %p279 = pneg %p155
      %p280 = pneg %p179
      %p281 = pneg %p176
      %p282 = pneg %p205
      %p283 = pneg %p202
      %p284 = scmp.lt.s32.totalorder %s22, 1
      %s285 = scalar_select %p284, %s22, 1
      %s286 = smul.addr %s285, 8
      %s287 = scalar_lea.vmem %s7, %s286
      %p288 = scmp.lt.s32.totalorder %s22, 1
      %s289 = scalar_select %p288, %s22, 1
      %p290 = scmp.lt.s32.totalorder %s23, 0
      %s291 = scalar_select %p290, %s23, 0
      %s292 = smul.addr %s289, 64
      %s293 = sadd.s32 %s291, %s292
      %s294 = smul.addr %s293, 8
      %s295 = scalar_lea.vmem %s0, %s294
      %p296 = scmp.lt.s32.totalorder %s22, 1
      %s297 = scalar_select %p296, %s22, 1
      %s298 = smul.addr %s297, 8
      %s299 = scalar_lea.vmem %s7, %s298
      %v301 = vld [vmem:[%s295] sm:$0xff]
      %v302 = vld [vmem:[%s295 + $0x8] sm:$0xff]
      %v303 = vld [vmem:[%s295 + $0x10] sm:$0xff]
      %v304 = vld [vmem:[%s295 + $0x18] sm:$0xff]
      %v305 = vld [vmem:[%s295 + $0x20] sm:$0xff]
      %v306 = vld [vmem:[%s295 + $0x28] sm:$0xff]
      %v307 = vld [vmem:[%s295 + $0x30] sm:$0xff]
      %v308 = vld [vmem:[%s295 + $0x38] sm:$0xff]
      %v309 = vld [vmem:[%s295 + $0x40] sm:$0xff]
      %v310 = vld [vmem:[%s295 + $0x48] sm:$0xff]
      %v311 = vld [vmem:[%s295 + $0x50] sm:$0xff]
      %v312 = vld [vmem:[%s295 + $0x58] sm:$0xff]
      %v313 = vld [vmem:[%s295 + $0x60] sm:$0xff]
      %v314 = vld [vmem:[%s295 + $0x68] sm:$0xff]
      %v315 = vld [vmem:[%s295 + $0x70] sm:$0xff]
      %v316 = vld [vmem:[%s295 + $0x78] sm:$0xff]
      %v317 = vld [vmem:[%s295 + $0x80] sm:$0xff]
      %v318 = vld [vmem:[%s295 + $0x88] sm:$0xff]
      %v319 = vld [vmem:[%s295 + $0x90] sm:$0xff]
      %v320 = vld [vmem:[%s295 + $0x98] sm:$0xff]
      %v321 = vld [vmem:[%s295 + $0xa0] sm:$0xff]
      %v322 = vld [vmem:[%s295 + $0xa8] sm:$0xff]
      %v323 = vld [vmem:[%s295 + $0xb0] sm:$0xff]
      %v324 = vld [vmem:[%s295 + $0xb8] sm:$0xff]
      %v325 = vld [vmem:[%s295 + $0xc0] sm:$0xff]
      %v326 = vld [vmem:[%s295 + $0xc8] sm:$0xff]
      %v327 = vld [vmem:[%s295 + $0xd0] sm:$0xff]
      %v328 = vld [vmem:[%s295 + $0xd8] sm:$0xff]
      %v329 = vld [vmem:[%s295 + $0xe0] sm:$0xff]
      %v330 = vld [vmem:[%s295 + $0xe8] sm:$0xff]
      %v331 = vld [vmem:[%s295 + $0xf0] sm:$0xff]
      %v332 = vld [vmem:[%s295 + $0xf8] sm:$0xff]
      %v333 = vld [vmem:[%s295 + $0x100] sm:$0xff]
      %v334 = vld [vmem:[%s295 + $0x108] sm:$0xff]
      %v335 = vld [vmem:[%s295 + $0x110] sm:$0xff]
      %v336 = vld [vmem:[%s295 + $0x118] sm:$0xff]
      %v337 = vld [vmem:[%s295 + $0x120] sm:$0xff]
      %v338 = vld [vmem:[%s295 + $0x128] sm:$0xff]
      %v339 = vld [vmem:[%s295 + $0x130] sm:$0xff]
      %v340 = vld [vmem:[%s295 + $0x138] sm:$0xff]
      %v341 = vld [vmem:[%s295 + $0x140] sm:$0xff]
      %v342 = vld [vmem:[%s295 + $0x148] sm:$0xff]
      %v343 = vld [vmem:[%s295 + $0x150] sm:$0xff]
      %v344 = vld [vmem:[%s295 + $0x158] sm:$0xff]
      %v345 = vld [vmem:[%s295 + $0x160] sm:$0xff]
      %v346 = vld [vmem:[%s295 + $0x168] sm:$0xff]
      %v347 = vld [vmem:[%s295 + $0x170] sm:$0xff]
      %v348 = vld [vmem:[%s295 + $0x178] sm:$0xff]
      %v349 = vld [vmem:[%s295 + $0x180] sm:$0xff]
      %v350 = vld [vmem:[%s295 + $0x188] sm:$0xff]
      %v351 = vld [vmem:[%s295 + $0x190] sm:$0xff]
      %v352 = vld [vmem:[%s295 + $0x198] sm:$0xff]
      %v353 = vld [vmem:[%s295 + $0x1a0] sm:$0xff]
      %v354 = vld [vmem:[%s295 + $0x1a8] sm:$0xff]
      %v355 = vld [vmem:[%s295 + $0x1b0] sm:$0xff]
      %v356 = vld [vmem:[%s295 + $0x1b8] sm:$0xff]
      %v357 = vld [vmem:[%s295 + $0x1c0] sm:$0xff]
      %v358 = vld [vmem:[%s295 + $0x1c8] sm:$0xff]
      %v359 = vld [vmem:[%s295 + $0x1d0] sm:$0xff]
      %v360 = vld [vmem:[%s295 + $0x1d8] sm:$0xff]
      %v361 = vld [vmem:[%s295 + $0x1e0] sm:$0xff]
      %v362 = vld [vmem:[%s295 + $0x1e8] sm:$0xff]
      %v363 = vld [vmem:[%s295 + $0x1f0] sm:$0xff]
      %v364 = vld [vmem:[%s295 + $0x1f8] sm:$0xff]
      %v365 = vpack.c.bf16 %v302, %v301
      %v366 = vpack.c.bf16 %v304, %v303
      %v367 = vpack.c.bf16 %v306, %v305
      %v368 = vpack.c.bf16 %v308, %v307
      %v369 = vpack.c.bf16 %v310, %v309
      %v370 = vpack.c.bf16 %v312, %v311
      %v371 = vpack.c.bf16 %v314, %v313
      %v372 = vpack.c.bf16 %v316, %v315
      %v373 = vpack.c.bf16 %v318, %v317
      %v374 = vpack.c.bf16 %v320, %v319
      %v375 = vpack.c.bf16 %v322, %v321
      %v376 = vpack.c.bf16 %v324, %v323
      %v377 = vpack.c.bf16 %v326, %v325
      %v378 = vpack.c.bf16 %v328, %v327
      %v379 = vpack.c.bf16 %v330, %v329
      %v380 = vpack.c.bf16 %v332, %v331
      %v381 = vpack.c.bf16 %v334, %v333
      %v382 = vpack.c.bf16 %v336, %v335
      %v383 = vpack.c.bf16 %v338, %v337
      %v384 = vpack.c.bf16 %v340, %v339
      %v385 = vpack.c.bf16 %v342, %v341
      %v386 = vpack.c.bf16 %v344, %v343
      %v387 = vpack.c.bf16 %v346, %v345
      %v388 = vpack.c.bf16 %v348, %v347
      %v389 = vpack.c.bf16 %v350, %v349
      %v390 = vpack.c.bf16 %v352, %v351
      %v391 = vpack.c.bf16 %v354, %v353
      %v392 = vpack.c.bf16 %v356, %v355
      %v393 = vpack.c.bf16 %v358, %v357
      %v394 = vpack.c.bf16 %v360, %v359
      %v395 = vpack.c.bf16 %v362, %v361
      %v396 = vpack.c.bf16 %v364, %v363
      %v397 = vld [vmem:[%s1] sm:$0xff]
      %v398 = vld [vmem:[%s1 + $0x8] sm:$0xff]
      %v399 = vld [vmem:[%s1 + $0x10] sm:$0xff]
      %v400 = vld [vmem:[%s1 + $0x18] sm:$0xff]
      %v401 = vld [vmem:[%s1 + $0x20] sm:$0xff]
      %v402 = vld [vmem:[%s1 + $0x28] sm:$0xff]
      %v403 = vld [vmem:[%s1 + $0x30] sm:$0xff]
      %v404 = vld [vmem:[%s1 + $0x38] sm:$0xff]
      %v405 = vld [vmem:[%s1 + $0x40] sm:$0xff]
      %v406 = vld [vmem:[%s1 + $0x48] sm:$0xff]
      %v407 = vld [vmem:[%s1 + $0x50] sm:$0xff]
      %v408 = vld [vmem:[%s1 + $0x58] sm:$0xff]
      %v409 = vld [vmem:[%s1 + $0x60] sm:$0xff]
      %v410 = vld [vmem:[%s1 + $0x68] sm:$0xff]
      %v411 = vld [vmem:[%s1 + $0x70] sm:$0xff]
      %v412 = vld [vmem:[%s1 + $0x78] sm:$0xff]
      %v413 = vld [vmem:[%s1 + $0x80] sm:$0xff]
      %v414 = vld [vmem:[%s1 + $0x88] sm:$0xff]
      %v415 = vld [vmem:[%s1 + $0x90] sm:$0xff]
      %v416 = vld [vmem:[%s1 + $0x98] sm:$0xff]
      %v417 = vld [vmem:[%s1 + $0xa0] sm:$0xff]
      %v418 = vld [vmem:[%s1 + $0xa8] sm:$0xff]
      %v419 = vld [vmem:[%s1 + $0xb0] sm:$0xff]
      %v420 = vld [vmem:[%s1 + $0xb8] sm:$0xff]
      %v421 = vld [vmem:[%s1 + $0xc0] sm:$0xff]
      %v422 = vld [vmem:[%s1 + $0xc8] sm:$0xff]
      %v423 = vld [vmem:[%s1 + $0xd0] sm:$0xff]
      %v424 = vld [vmem:[%s1 + $0xd8] sm:$0xff]
      %v425 = vld [vmem:[%s1 + $0xe0] sm:$0xff]
      %v426 = vld [vmem:[%s1 + $0xe8] sm:$0xff]
      %v427 = vld [vmem:[%s1 + $0xf0] sm:$0xff]
      %v428 = vld [vmem:[%s1 + $0xf8] sm:$0xff]
      %v429 = vld [vmem:[%s1 + $0x100] sm:$0xff]
      %v430 = vld [vmem:[%s1 + $0x108] sm:$0xff]
      %v431 = vld [vmem:[%s1 + $0x110] sm:$0xff]
      %v432 = vld [vmem:[%s1 + $0x118] sm:$0xff]
      %v433 = vld [vmem:[%s1 + $0x120] sm:$0xff]
      %v434 = vld [vmem:[%s1 + $0x128] sm:$0xff]
      %v435 = vld [vmem:[%s1 + $0x130] sm:$0xff]
      %v436 = vld [vmem:[%s1 + $0x138] sm:$0xff]
      %v437 = vld [vmem:[%s1 + $0x140] sm:$0xff]
      %v438 = vld [vmem:[%s1 + $0x148] sm:$0xff]
      %v439 = vld [vmem:[%s1 + $0x150] sm:$0xff]
      %v440 = vld [vmem:[%s1 + $0x158] sm:$0xff]
      %v441 = vld [vmem:[%s1 + $0x160] sm:$0xff]
      %v442 = vld [vmem:[%s1 + $0x168] sm:$0xff]
      %v443 = vld [vmem:[%s1 + $0x170] sm:$0xff]
      %v444 = vld [vmem:[%s1 + $0x178] sm:$0xff]
      %v445 = vld [vmem:[%s1 + $0x180] sm:$0xff]
      %v446 = vld [vmem:[%s1 + $0x188] sm:$0xff]
      %v447 = vld [vmem:[%s1 + $0x190] sm:$0xff]
      %v448 = vld [vmem:[%s1 + $0x198] sm:$0xff]
      %v449 = vld [vmem:[%s1 + $0x1a0] sm:$0xff]
      %v450 = vld [vmem:[%s1 + $0x1a8] sm:$0xff]
      %v451 = vld [vmem:[%s1 + $0x1b0] sm:$0xff]
      %v452 = vld [vmem:[%s1 + $0x1b8] sm:$0xff]
      %v453 = vld [vmem:[%s1 + $0x1c0] sm:$0xff]
      %v454 = vld [vmem:[%s1 + $0x1c8] sm:$0xff]
      %v455 = vld [vmem:[%s1 + $0x1d0] sm:$0xff]
      %v456 = vld [vmem:[%s1 + $0x1d8] sm:$0xff]
      %v457 = vld [vmem:[%s1 + $0x1e0] sm:$0xff]
      %v458 = vld [vmem:[%s1 + $0x1e8] sm:$0xff]
      %v459 = vld [vmem:[%s1 + $0x1f0] sm:$0xff]
      %v460 = vld [vmem:[%s1 + $0x1f8] sm:$0xff]
      %v461 = vld [vmem:[%s2] sm:$0xff]
      %v462 = vld [vmem:[%s2 + $0x8] sm:$0xff]
      %v463 = vld [vmem:[%s2 + $0x10] sm:$0xff]
      %v464 = vld [vmem:[%s2 + $0x18] sm:$0xff]
      %v465 = vld [vmem:[%s2 + $0x20] sm:$0xff]
      %v466 = vld [vmem:[%s2 + $0x28] sm:$0xff]
      %v467 = vld [vmem:[%s2 + $0x30] sm:$0xff]
      %v468 = vld [vmem:[%s2 + $0x38] sm:$0xff]
      %v469 = vld [vmem:[%s2 + $0x40] sm:$0xff]
      %v470 = vld [vmem:[%s2 + $0x48] sm:$0xff]
      %v471 = vld [vmem:[%s2 + $0x50] sm:$0xff]
      %v472 = vld [vmem:[%s2 + $0x58] sm:$0xff]
      %v473 = vld [vmem:[%s2 + $0x60] sm:$0xff]
      %v474 = vld [vmem:[%s2 + $0x68] sm:$0xff]
      %v475 = vld [vmem:[%s2 + $0x70] sm:$0xff]
      %v476 = vld [vmem:[%s2 + $0x78] sm:$0xff]
      %v477 = vld [vmem:[%s2 + $0x80] sm:$0xff]
      %v478 = vld [vmem:[%s2 + $0x88] sm:$0xff]
      %v479 = vld [vmem:[%s2 + $0x90] sm:$0xff]
      %v480 = vld [vmem:[%s2 + $0x98] sm:$0xff]
      %v481 = vld [vmem:[%s2 + $0xa0] sm:$0xff]
      %v482 = vld [vmem:[%s2 + $0xa8] sm:$0xff]
      %v483 = vld [vmem:[%s2 + $0xb0] sm:$0xff]
      %v484 = vld [vmem:[%s2 + $0xb8] sm:$0xff]
      %v485 = vld [vmem:[%s2 + $0xc0] sm:$0xff]
      %v486 = vld [vmem:[%s2 + $0xc8] sm:$0xff]
      %v487 = vld [vmem:[%s2 + $0xd0] sm:$0xff]
      %v488 = vld [vmem:[%s2 + $0xd8] sm:$0xff]
      %v489 = vld [vmem:[%s2 + $0xe0] sm:$0xff]
      %v490 = vld [vmem:[%s2 + $0xe8] sm:$0xff]
      %v491 = vld [vmem:[%s2 + $0xf0] sm:$0xff]
      %v492 = vld [vmem:[%s2 + $0xf8] sm:$0xff]
      %494 = vset.pattern.permute.xlu0 0
      %495 = vperm.xlu0 %494, %v461
      %v496 = vpop.permute.xlu0 %495
      %499 = vset.pattern.permute.xlu0 0
      %500 = vperm.xlu0 %499, %v462
      %v501 = vpop.permute.xlu0 %500
      %504 = vset.pattern.permute.xlu0 0
      %505 = vperm.xlu0 %504, %v463
      %v506 = vpop.permute.xlu0 %505
      %509 = vset.pattern.permute.xlu0 0
      %510 = vperm.xlu0 %509, %v464
      %v511 = vpop.permute.xlu0 %510
      %514 = vset.pattern.permute.xlu0 0
      %515 = vperm.xlu0 %514, %v465
      %v516 = vpop.permute.xlu0 %515
      %519 = vset.pattern.permute.xlu0 0
      %520 = vperm.xlu0 %519, %v466
      %v521 = vpop.permute.xlu0 %520
      %524 = vset.pattern.permute.xlu0 0
      %525 = vperm.xlu0 %524, %v467
      %v526 = vpop.permute.xlu0 %525
      %529 = vset.pattern.permute.xlu0 0
      %530 = vperm.xlu0 %529, %v468
      %v531 = vpop.permute.xlu0 %530
      %534 = vset.pattern.permute.xlu0 0
      %535 = vperm.xlu0 %534, %v469
      %v536 = vpop.permute.xlu0 %535
      %539 = vset.pattern.permute.xlu0 0
      %540 = vperm.xlu0 %539, %v470
      %v541 = vpop.permute.xlu0 %540
      %544 = vset.pattern.permute.xlu0 0
      %545 = vperm.xlu0 %544, %v471
      %v546 = vpop.permute.xlu0 %545
      %549 = vset.pattern.permute.xlu0 0
      %550 = vperm.xlu0 %549, %v472
      %v551 = vpop.permute.xlu0 %550
      %554 = vset.pattern.permute.xlu0 0
      %555 = vperm.xlu0 %554, %v473
      %v556 = vpop.permute.xlu0 %555
      %559 = vset.pattern.permute.xlu0 0
      %560 = vperm.xlu0 %559, %v474
      %v561 = vpop.permute.xlu0 %560
      %564 = vset.pattern.permute.xlu0 0
      %565 = vperm.xlu0 %564, %v475
      %v566 = vpop.permute.xlu0 %565
      %569 = vset.pattern.permute.xlu0 0
      %570 = vperm.xlu0 %569, %v476
      %v571 = vpop.permute.xlu0 %570
      %574 = vset.pattern.permute.xlu0 0
      %575 = vperm.xlu0 %574, %v477
      %v576 = vpop.permute.xlu0 %575
      %579 = vset.pattern.permute.xlu0 0
      %580 = vperm.xlu0 %579, %v478
      %v581 = vpop.permute.xlu0 %580
      %584 = vset.pattern.permute.xlu0 0
      %585 = vperm.xlu0 %584, %v479
      %v586 = vpop.permute.xlu0 %585
      %589 = vset.pattern.permute.xlu0 0
      %590 = vperm.xlu0 %589, %v480
      %v591 = vpop.permute.xlu0 %590
      %594 = vset.pattern.permute.xlu0 0
      %595 = vperm.xlu0 %594, %v481
      %v596 = vpop.permute.xlu0 %595
      %599 = vset.pattern.permute.xlu0 0
      %600 = vperm.xlu0 %599, %v482
      %v601 = vpop.permute.xlu0 %600
      %604 = vset.pattern.permute.xlu0 0
      %605 = vperm.xlu0 %604, %v483
      %v606 = vpop.permute.xlu0 %605
      %609 = vset.pattern.permute.xlu0 0
      %610 = vperm.xlu0 %609, %v484
      %v611 = vpop.permute.xlu0 %610
      %614 = vset.pattern.permute.xlu0 0
      %615 = vperm.xlu0 %614, %v485
      %v616 = vpop.permute.xlu0 %615
      %619 = vset.pattern.permute.xlu0 0
      %620 = vperm.xlu0 %619, %v486
      %v621 = vpop.permute.xlu0 %620
      %624 = vset.pattern.permute.xlu0 0
      %625 = vperm.xlu0 %624, %v487
      %v626 = vpop.permute.xlu0 %625
      %629 = vset.pattern.permute.xlu0 0
      %630 = vperm.xlu0 %629, %v488
      %v631 = vpop.permute.xlu0 %630
      %634 = vset.pattern.permute.xlu0 0
      %635 = vperm.xlu0 %634, %v489
      %v636 = vpop.permute.xlu0 %635
      %639 = vset.pattern.permute.xlu0 0
      %640 = vperm.xlu0 %639, %v490
      %v641 = vpop.permute.xlu0 %640
      %644 = vset.pattern.permute.xlu0 0
      %645 = vperm.xlu0 %644, %v491
      %v646 = vpop.permute.xlu0 %645
      %649 = vset.pattern.permute.xlu0 0
      %650 = vperm.xlu0 %649, %v492
      %v651 = vpop.permute.xlu0 %650
      %v717 = vunpack.c.l.b16 %v397
      %v718 = vunpack.c.h.b16 %v397
      %v719 = vunpack.c.l.b16 %v398
      %v720 = vunpack.c.h.b16 %v398
      %v721 = vunpack.c.l.b16 %v399
      %v722 = vunpack.c.h.b16 %v399
      %v723 = vunpack.c.l.b16 %v400
      %v724 = vunpack.c.h.b16 %v400
      %v725 = vunpack.c.l.b16 %v401
      %v726 = vunpack.c.h.b16 %v401
      %v727 = vunpack.c.l.b16 %v402
      %v728 = vunpack.c.h.b16 %v402
      %v729 = vunpack.c.l.b16 %v403
      %v730 = vunpack.c.h.b16 %v403
      %v731 = vunpack.c.l.b16 %v404
      %v732 = vunpack.c.h.b16 %v404
      %v733 = vunpack.c.l.b16 %v405
      %v734 = vunpack.c.h.b16 %v405
      %v735 = vunpack.c.l.b16 %v406
      %v736 = vunpack.c.h.b16 %v406
      %v737 = vunpack.c.l.b16 %v407
      %v738 = vunpack.c.h.b16 %v407
      %v739 = vunpack.c.l.b16 %v408
      %v740 = vunpack.c.h.b16 %v408
      %v741 = vunpack.c.l.b16 %v409
      %v742 = vunpack.c.h.b16 %v409
      %v743 = vunpack.c.l.b16 %v410
      %v744 = vunpack.c.h.b16 %v410
      %v745 = vunpack.c.l.b16 %v411
      %v746 = vunpack.c.h.b16 %v411
      %v747 = vunpack.c.l.b16 %v412
      %v748 = vunpack.c.h.b16 %v412
      %v749 = vunpack.c.l.b16 %v413
      %v750 = vunpack.c.h.b16 %v413
      %v751 = vunpack.c.l.b16 %v414
      %v752 = vunpack.c.h.b16 %v414
      %v753 = vunpack.c.l.b16 %v415
      %v754 = vunpack.c.h.b16 %v415
      %v755 = vunpack.c.l.b16 %v416
      %v756 = vunpack.c.h.b16 %v416
      %v757 = vunpack.c.l.b16 %v417
      %v758 = vunpack.c.h.b16 %v417
      %v759 = vunpack.c.l.b16 %v418
      %v760 = vunpack.c.h.b16 %v418
      %v761 = vunpack.c.l.b16 %v419
      %v762 = vunpack.c.h.b16 %v419
      %v763 = vunpack.c.l.b16 %v420
      %v764 = vunpack.c.h.b16 %v420
      %v765 = vunpack.c.l.b16 %v421
      %v766 = vunpack.c.h.b16 %v421
      %v767 = vunpack.c.l.b16 %v422
      %v768 = vunpack.c.h.b16 %v422
      %v769 = vunpack.c.l.b16 %v423
      %v770 = vunpack.c.h.b16 %v423
      %v771 = vunpack.c.l.b16 %v424
      %v772 = vunpack.c.h.b16 %v424
      %v773 = vunpack.c.l.b16 %v425
      %v774 = vunpack.c.h.b16 %v425
      %v775 = vunpack.c.l.b16 %v426
      %v776 = vunpack.c.h.b16 %v426
      %v777 = vunpack.c.l.b16 %v427
      %v778 = vunpack.c.h.b16 %v427
      %v779 = vunpack.c.l.b16 %v428
      %v780 = vunpack.c.h.b16 %v428
      %v781 = vunpack.c.l.b16 %v429
      %v782 = vunpack.c.h.b16 %v429
      %v783 = vunpack.c.l.b16 %v430
      %v784 = vunpack.c.h.b16 %v430
      %v785 = vunpack.c.l.b16 %v431
      %v786 = vunpack.c.h.b16 %v431
      %v787 = vunpack.c.l.b16 %v432
      %v788 = vunpack.c.h.b16 %v432
      %v789 = vunpack.c.l.b16 %v433
      %v790 = vunpack.c.h.b16 %v433
      %v791 = vunpack.c.l.b16 %v434
      %v792 = vunpack.c.h.b16 %v434
      %v793 = vunpack.c.l.b16 %v435
      %v794 = vunpack.c.h.b16 %v435
      %v795 = vunpack.c.l.b16 %v436
      %v796 = vunpack.c.h.b16 %v436
      %v797 = vunpack.c.l.b16 %v437
      %v798 = vunpack.c.h.b16 %v437
      %v799 = vunpack.c.l.b16 %v438
      %v800 = vunpack.c.h.b16 %v438
      %v801 = vunpack.c.l.b16 %v439
      %v802 = vunpack.c.h.b16 %v439
      %v803 = vunpack.c.l.b16 %v440
      %v804 = vunpack.c.h.b16 %v440
      %v805 = vunpack.c.l.b16 %v441
      %v806 = vunpack.c.h.b16 %v441
      %v807 = vunpack.c.l.b16 %v442
      %v808 = vunpack.c.h.b16 %v442
      %v809 = vunpack.c.l.b16 %v443
      %v810 = vunpack.c.h.b16 %v443
      %v811 = vunpack.c.l.b16 %v444
      %v812 = vunpack.c.h.b16 %v444
      %v813 = vunpack.c.l.b16 %v445
      %v814 = vunpack.c.h.b16 %v445
      %v815 = vunpack.c.l.b16 %v446
      %v816 = vunpack.c.h.b16 %v446
      %v817 = vunpack.c.l.b16 %v447
      %v818 = vunpack.c.h.b16 %v447
      %v819 = vunpack.c.l.b16 %v448
      %v820 = vunpack.c.h.b16 %v448
      %v821 = vunpack.c.l.b16 %v449
      %v822 = vunpack.c.h.b16 %v449
      %v823 = vunpack.c.l.b16 %v450
      %v824 = vunpack.c.h.b16 %v450
      %v825 = vunpack.c.l.b16 %v451
      %v826 = vunpack.c.h.b16 %v451
      %v827 = vunpack.c.l.b16 %v452
      %v828 = vunpack.c.h.b16 %v452
      %v829 = vunpack.c.l.b16 %v453
      %v830 = vunpack.c.h.b16 %v453
      %v831 = vunpack.c.l.b16 %v454
      %v832 = vunpack.c.h.b16 %v454
      %v833 = vunpack.c.l.b16 %v455
      %v834 = vunpack.c.h.b16 %v455
      %v835 = vunpack.c.l.b16 %v456
      %v836 = vunpack.c.h.b16 %v456
      %v837 = vunpack.c.l.b16 %v457
      %v838 = vunpack.c.h.b16 %v457
      %v839 = vunpack.c.l.b16 %v458
      %v840 = vunpack.c.h.b16 %v458
      %v841 = vunpack.c.l.b16 %v459
      %v842 = vunpack.c.h.b16 %v459
      %v843 = vunpack.c.l.b16 %v460
      %v844 = vunpack.c.h.b16 %v460
      %v845 = vpack.c.b16 %v721, %v717
      %v846 = vpack.c.b16 %v722, %v718
      %v847 = vpack.c.b16 %v723, %v719
      %v848 = vpack.c.b16 %v724, %v720
      %v849 = vpack.c.b16 %v729, %v725
      %v850 = vpack.c.b16 %v730, %v726
      %v851 = vpack.c.b16 %v731, %v727
      %v852 = vpack.c.b16 %v732, %v728
      %v853 = vpack.c.b16 %v737, %v733
      %v854 = vpack.c.b16 %v738, %v734
      %v855 = vpack.c.b16 %v739, %v735
      %v856 = vpack.c.b16 %v740, %v736
      %v857 = vpack.c.b16 %v745, %v741
      %v858 = vpack.c.b16 %v746, %v742
      %v859 = vpack.c.b16 %v747, %v743
      %v860 = vpack.c.b16 %v748, %v744
      %v861 = vpack.c.b16 %v753, %v749
      %v862 = vpack.c.b16 %v754, %v750
      %v863 = vpack.c.b16 %v755, %v751
      %v864 = vpack.c.b16 %v756, %v752
      %v865 = vpack.c.b16 %v761, %v757
      %v866 = vpack.c.b16 %v762, %v758
      %v867 = vpack.c.b16 %v763, %v759
      %v868 = vpack.c.b16 %v764, %v760
      %v869 = vpack.c.b16 %v769, %v765
      %v870 = vpack.c.b16 %v770, %v766
      %v871 = vpack.c.b16 %v771, %v767
      %v872 = vpack.c.b16 %v772, %v768
      %v873 = vpack.c.b16 %v777, %v773
      %v874 = vpack.c.b16 %v778, %v774
      %v875 = vpack.c.b16 %v779, %v775
      %v876 = vpack.c.b16 %v780, %v776
      %v877 = vpack.c.b16 %v785, %v781
      %v878 = vpack.c.b16 %v786, %v782
      %v879 = vpack.c.b16 %v787, %v783
      %v880 = vpack.c.b16 %v788, %v784
      %v881 = vpack.c.b16 %v793, %v789
      %v882 = vpack.c.b16 %v794, %v790
      %v883 = vpack.c.b16 %v795, %v791
      %v884 = vpack.c.b16 %v796, %v792
      %v885 = vpack.c.b16 %v801, %v797
      %v886 = vpack.c.b16 %v802, %v798
      %v887 = vpack.c.b16 %v803, %v799
      %v888 = vpack.c.b16 %v804, %v800
      %v889 = vpack.c.b16 %v809, %v805
      %v890 = vpack.c.b16 %v810, %v806
      %v891 = vpack.c.b16 %v811, %v807
      %v892 = vpack.c.b16 %v812, %v808
      %v893 = vpack.c.b16 %v817, %v813
      %v894 = vpack.c.b16 %v818, %v814
      %v895 = vpack.c.b16 %v819, %v815
      %v896 = vpack.c.b16 %v820, %v816
      %v897 = vpack.c.b16 %v825, %v821
      %v898 = vpack.c.b16 %v826, %v822
      %v899 = vpack.c.b16 %v827, %v823
      %v900 = vpack.c.b16 %v828, %v824
      %v901 = vpack.c.b16 %v833, %v829
      %v902 = vpack.c.b16 %v834, %v830
      %v903 = vpack.c.b16 %v835, %v831
      %v904 = vpack.c.b16 %v836, %v832
      %v905 = vpack.c.b16 %v841, %v837
      %v906 = vpack.c.b16 %v842, %v838
      %v907 = vpack.c.b16 %v843, %v839
      %v908 = vpack.c.b16 %v844, %v840
      %973 = vmatprep.subr.bf16.mxu0 0
      %974 = vmatpush1.bf16.msra.mxu0 %v365
      %975 = vmatprep.subr.bf16.mxu0 0
      %976 = vmatpush1.bf16.msra.mxu0 %v366
      %977 = vmatprep.subr.bf16.mxu0 0
      %978 = vmatpush1.bf16.msra.mxu0 %v367
      %979 = vmatprep.subr.bf16.mxu0 0
      %980 = vmatpush1.bf16.msra.mxu0 %v368
      %981 = vmatprep.subr.bf16.mxu0 0
      %982 = vmatpush1.bf16.msra.mxu0 %v369
      %983 = vmatprep.subr.bf16.mxu0 0
      %984 = vmatpush1.bf16.msra.mxu0 %v370
      %985 = vmatprep.subr.bf16.mxu0 0
      %986 = vmatpush1.bf16.msra.mxu0 %v371
      %987 = vmatprep.subr.bf16.mxu0 0
      %988 = vmatpush1.bf16.msra.mxu0 %v372
      %989 = vmatprep.subr.bf16.mxu0 0
      %990 = vmatpush1.bf16.msra.mxu0 %v373
      %991 = vmatprep.subr.bf16.mxu0 0
      %992 = vmatpush1.bf16.msra.mxu0 %v374
      %993 = vmatprep.subr.bf16.mxu0 0
      %994 = vmatpush1.bf16.msra.mxu0 %v375
      %995 = vmatprep.subr.bf16.mxu0 0
      %996 = vmatpush1.bf16.msra.mxu0 %v376
      %997 = vmatprep.subr.bf16.mxu0 0
      %998 = vmatpush1.bf16.msra.mxu0 %v377
      %999 = vmatprep.subr.bf16.mxu0 0
      %1000 = vmatpush1.bf16.msra.mxu0 %v378
      %1001 = vmatprep.subr.bf16.mxu0 0
      %1002 = vmatpush1.bf16.msra.mxu0 %v379
      %1003 = vmatprep.subr.bf16.mxu0 0
      %1004 = vmatpush1.bf16.msra.mxu0 %v380
      %1005 = vmatprep.mubr.bf16.mxu0 %v846
      %1006 = vmatmul.mubr.bf16.gmra.mrb[0].mxu0 %v845
      %v1007 = vpop.f32.mrb[0].mxu0
      %v1008 = vadd.f32 %v496, %v1007
      %v1009 = vpop.f32.mrb[0].mxu0
      %v1010 = vpop.f32.mrb[0].mxu0
      %v1011 = vadd.f32 %v501, %v1010
      %v1012 = vpop.f32.mrb[0].mxu0
      %1013 = vmatprep.mubr.bf16.mxu0 %v850
      %1014 = vmatmul.mubr.bf16.gmra.mrb[0].mxu0 %v849
      %v1015 = vpop.f32.mrb[0].mxu0
      %v1016 = vadd.f32 %v506, %v1015
      %v1017 = vpop.f32.mrb[0].mxu0
      %v1018 = vpop.f32.mrb[0].mxu0
      %v1019 = vadd.f32 %v511, %v1018
      %v1020 = vpop.f32.mrb[0].mxu0
      %1021 = vmatprep.mubr.bf16.mxu0 %v854
      %1022 = vmatmul.mubr.bf16.gmra.mrb[0].mxu0 %v853
      %v1023 = vpop.f32.mrb[0].mxu0
      %v1024 = vadd.f32 %v516, %v1023
      %v1025 = vpop.f32.mrb[0].mxu0
      %v1026 = vpop.f32.mrb[0].mxu0
      %v1027 = vadd.f32 %v521, %v1026
      %v1028 = vpop.f32.mrb[0].mxu0
      %1029 = vmatprep.mubr.bf16.mxu0 %v858
      %1030 = vmatmul.mubr.bf16.gmra.mrb[0].mxu0 %v857
      %v1031 = vpop.f32.mrb[0].mxu0
      %v1032 = vadd.f32 %v526, %v1031
      %v1033 = vpop.f32.mrb[0].mxu0
      %v1034 = vpop.f32.mrb[0].mxu0
      %v1035 = vadd.f32 %v531, %v1034
      %v1036 = vpop.f32.mrb[0].mxu0
      %1037 = vmatprep.mubr.bf16.mxu0 %v862
      %1038 = vmatmul.mubr.bf16.gmra.mrb[0].mxu0 %v861
      %v1039 = vpop.f32.mrb[0].mxu0
      %v1040 = vadd.f32 %v536, %v1039
      %v1041 = vpop.f32.mrb[0].mxu0
      %v1042 = vpop.f32.mrb[0].mxu0
      %v1043 = vadd.f32 %v541, %v1042
      %v1044 = vpop.f32.mrb[0].mxu0
      %1045 = vmatprep.mubr.bf16.mxu0 %v866
      %1046 = vmatmul.mubr.bf16.gmra.mrb[0].mxu0 %v865
      %v1047 = vpop.f32.mrb[0].mxu0
      %v1048 = vadd.f32 %v546, %v1047
      %v1049 = vpop.f32.mrb[0].mxu0
      %v1050 = vpop.f32.mrb[0].mxu0
      %v1051 = vadd.f32 %v551, %v1050
      %v1052 = vpop.f32.mrb[0].mxu0
      %1053 = vmatprep.mubr.bf16.mxu0 %v870
      %1054 = vmatmul.mubr.bf16.gmra.mrb[0].mxu0 %v869
      %v1055 = vpop.f32.mrb[0].mxu0
      %v1056 = vadd.f32 %v556, %v1055
      %v1057 = vpop.f32.mrb[0].mxu0
      %v1058 = vpop.f32.mrb[0].mxu0
      %v1059 = vadd.f32 %v561, %v1058
      %v1060 = vpop.f32.mrb[0].mxu0
      %1061 = vmatprep.mubr.bf16.mxu0 %v874
      %1062 = vmatmul.mubr.bf16.gmra.mrb[0].mxu0 %v873
      %v1063 = vpop.f32.mrb[0].mxu0
      %v1064 = vadd.f32 %v566, %v1063
      %v1065 = vpop.f32.mrb[0].mxu0
      %v1066 = vpop.f32.mrb[0].mxu0
      %v1067 = vadd.f32 %v571, %v1066
      %v1068 = vpop.f32.mrb[0].mxu0
      %1069 = vmatprep.mubr.bf16.mxu0 %v878
      %1070 = vmatmul.mubr.bf16.gmra.mrb[0].mxu0 %v877
      %v1071 = vpop.f32.mrb[0].mxu0
      %v1072 = vadd.f32 %v576, %v1071
      %v1073 = vpop.f32.mrb[0].mxu0
      %v1074 = vpop.f32.mrb[0].mxu0
      %v1075 = vadd.f32 %v581, %v1074
      %v1076 = vpop.f32.mrb[0].mxu0
      %1077 = vmatprep.mubr.bf16.mxu0 %v882
      %1078 = vmatmul.mubr.bf16.gmra.mrb[0].mxu0 %v881
      %v1079 = vpop.f32.mrb[0].mxu0
      %v1080 = vadd.f32 %v586, %v1079
      %v1081 = vpop.f32.mrb[0].mxu0
      %v1082 = vpop.f32.mrb[0].mxu0
      %v1083 = vadd.f32 %v591, %v1082
      %v1084 = vpop.f32.mrb[0].mxu0
      %1085 = vmatprep.mubr.bf16.mxu0 %v886
      %1086 = vmatmul.mubr.bf16.gmra.mrb[0].mxu0 %v885
      %v1087 = vpop.f32.mrb[0].mxu0
      %v1088 = vadd.f32 %v596, %v1087
      %v1089 = vpop.f32.mrb[0].mxu0
      %v1090 = vpop.f32.mrb[0].mxu0
      %v1091 = vadd.f32 %v601, %v1090
      %v1092 = vpop.f32.mrb[0].mxu0
      %1093 = vmatprep.mubr.bf16.mxu0 %v890
      %1094 = vmatmul.mubr.bf16.gmra.mrb[0].mxu0 %v889
      %v1095 = vpop.f32.mrb[0].mxu0
      %v1096 = vadd.f32 %v606, %v1095
      %v1097 = vpop.f32.mrb[0].mxu0
      %v1098 = vpop.f32.mrb[0].mxu0
      %v1099 = vadd.f32 %v611, %v1098
      %v1100 = vpop.f32.mrb[0].mxu0
      %1101 = vmatprep.mubr.bf16.mxu0 %v894
      %1102 = vmatmul.mubr.bf16.gmra.mrb[0].mxu0 %v893
      %v1103 = vpop.f32.mrb[0].mxu0
      %v1104 = vadd.f32 %v616, %v1103
      %v1105 = vpop.f32.mrb[0].mxu0
      %v1106 = vpop.f32.mrb[0].mxu0
      %v1107 = vadd.f32 %v621, %v1106
      %v1108 = vpop.f32.mrb[0].mxu0
      %1109 = vmatprep.mubr.bf16.mxu0 %v898
      %1110 = vmatmul.mubr.bf16.gmra.mrb[0].mxu0 %v897
      %v1111 = vpop.f32.mrb[0].mxu0
      %v1112 = vadd.f32 %v626, %v1111
      %v1113 = vpop.f32.mrb[0].mxu0
      %v1114 = vpop.f32.mrb[0].mxu0
      %v1115 = vadd.f32 %v631, %v1114
      %v1116 = vpop.f32.mrb[0].mxu0
      %1117 = vmatprep.mubr.bf16.mxu0 %v902
      %1118 = vmatmul.mubr.bf16.gmra.mrb[0].mxu0 %v901
      %v1119 = vpop.f32.mrb[0].mxu0
      %v1120 = vadd.f32 %v636, %v1119
      %v1121 = vpop.f32.mrb[0].mxu0
      %v1122 = vpop.f32.mrb[0].mxu0
      %v1123 = vadd.f32 %v641, %v1122
      %v1124 = vpop.f32.mrb[0].mxu0
      %1125 = vmatprep.mubr.bf16.mxu0 %v906
      %1126 = vmatmul.mubr.bf16.gmra.mrb[0].mxu0 %v905
      %v1127 = vpop.f32.mrb[0].mxu0
      %v1128 = vadd.f32 %v646, %v1127
      %v1129 = vpop.f32.mrb[0].mxu0
      %v1130 = vpop.f32.mrb[0].mxu0
      %v1131 = vadd.f32 %v651, %v1130
      %v1132 = vpop.f32.mrb[0].mxu0
      %1133 = vdwg.mxu0
      %1134 = vmatprep.subr.bf16.mxu0 0
      %1135 = vmatpush1.bf16.msra.mxu0 %v381
      %1136 = vmatprep.subr.bf16.mxu0 0
      %1137 = vmatpush1.bf16.msra.mxu0 %v382
      %1138 = vmatprep.subr.bf16.mxu0 0
      %1139 = vmatpush1.bf16.msra.mxu0 %v383
      %1140 = vmatprep.subr.bf16.mxu0 0
      %1141 = vmatpush1.bf16.msra.mxu0 %v384
      %1142 = vmatprep.subr.bf16.mxu0 0
      %1143 = vmatpush1.bf16.msra.mxu0 %v385
      %1144 = vmatprep.subr.bf16.mxu0 0
      %1145 = vmatpush1.bf16.msra.mxu0 %v386
      %1146 = vmatprep.subr.bf16.mxu0 0
      %1147 = vmatpush1.bf16.msra.mxu0 %v387
      %1148 = vmatprep.subr.bf16.mxu0 0
      %1149 = vmatpush1.bf16.msra.mxu0 %v388
      %1150 = vmatprep.subr.bf16.mxu0 0
      %1151 = vmatpush1.bf16.msra.mxu0 %v389
      %1152 = vmatprep.subr.bf16.mxu0 0
      %1153 = vmatpush1.bf16.msra.mxu0 %v390
      %1154 = vmatprep.subr.bf16.mxu0 0
      %1155 = vmatpush1.bf16.msra.mxu0 %v391
      %1156 = vmatprep.subr.bf16.mxu0 0
      %1157 = vmatpush1.bf16.msra.mxu0 %v392
      %1158 = vmatprep.subr.bf16.mxu0 0
      %1159 = vmatpush1.bf16.msra.mxu0 %v393
      %1160 = vmatprep.subr.bf16.mxu0 0
      %1161 = vmatpush1.bf16.msra.mxu0 %v394
      %1162 = vmatprep.subr.bf16.mxu0 0
      %1163 = vmatpush1.bf16.msra.mxu0 %v395
      %1164 = vmatprep.subr.bf16.mxu0 0
      %1165 = vmatpush1.bf16.msra.mxu0 %v396
      %1166 = vmatprep.mubr.bf16.mxu0 %v848
      %1167 = vmatmul.mubr.bf16.gmra.mrb[0].mxu0 %v847
      %v1168 = vpop.f32.mrb[0].mxu0
      %v1169 = vadd.f32 %v1008, %v1168
      %v1170 = vpop.f32.mrb[0].mxu0
      %v1171 = vpop.f32.mrb[0].mxu0
      %v1172 = vadd.f32 %v1011, %v1171
      %v1173 = vpop.f32.mrb[0].mxu0
      %1174 = vmatprep.mubr.bf16.mxu0 %v852
      %1175 = vmatmul.mubr.bf16.gmra.mrb[0].mxu0 %v851
      %v1176 = vpop.f32.mrb[0].mxu0
      %v1177 = vadd.f32 %v1016, %v1176
      %v1178 = vpop.f32.mrb[0].mxu0
      %v1179 = vpop.f32.mrb[0].mxu0
      %v1180 = vadd.f32 %v1019, %v1179
      %v1181 = vpop.f32.mrb[0].mxu0
      %1182 = vmatprep.mubr.bf16.mxu0 %v856
      %1183 = vmatmul.mubr.bf16.gmra.mrb[0].mxu0 %v855
      %v1184 = vpop.f32.mrb[0].mxu0
      %v1185 = vadd.f32 %v1024, %v1184
      %v1186 = vpop.f32.mrb[0].mxu0
      %v1187 = vpop.f32.mrb[0].mxu0
      %v1188 = vadd.f32 %v1027, %v1187
      %v1189 = vpop.f32.mrb[0].mxu0
      %1190 = vmatprep.mubr.bf16.mxu0 %v860
      %1191 = vmatmul.mubr.bf16.gmra.mrb[0].mxu0 %v859
      %v1192 = vpop.f32.mrb[0].mxu0
      %v1193 = vadd.f32 %v1032, %v1192
      %v1194 = vpop.f32.mrb[0].mxu0
      %v1195 = vpop.f32.mrb[0].mxu0
      %v1196 = vadd.f32 %v1035, %v1195
      %v1197 = vpop.f32.mrb[0].mxu0
      %1198 = vmatprep.mubr.bf16.mxu0 %v864
      %1199 = vmatmul.mubr.bf16.gmra.mrb[0].mxu0 %v863
      %v1200 = vpop.f32.mrb[0].mxu0
      %v1201 = vadd.f32 %v1040, %v1200
      %v1202 = vpop.f32.mrb[0].mxu0
      %v1203 = vpop.f32.mrb[0].mxu0
      %v1204 = vadd.f32 %v1043, %v1203
      %v1205 = vpop.f32.mrb[0].mxu0
      %1206 = vmatprep.mubr.bf16.mxu0 %v868
      %1207 = vmatmul.mubr.bf16.gmra.mrb[0].mxu0 %v867
      %v1208 = vpop.f32.mrb[0].mxu0
      %v1209 = vadd.f32 %v1048, %v1208
      %v1210 = vpop.f32.mrb[0].mxu0
      %v1211 = vpop.f32.mrb[0].mxu0
      %v1212 = vadd.f32 %v1051, %v1211
      %v1213 = vpop.f32.mrb[0].mxu0
      %1214 = vmatprep.mubr.bf16.mxu0 %v872
      %1215 = vmatmul.mubr.bf16.gmra.mrb[0].mxu0 %v871
      %v1216 = vpop.f32.mrb[0].mxu0
      %v1217 = vadd.f32 %v1056, %v1216
      %v1218 = vpop.f32.mrb[0].mxu0
      %v1219 = vpop.f32.mrb[0].mxu0
      %v1220 = vadd.f32 %v1059, %v1219
      %v1221 = vpop.f32.mrb[0].mxu0
      %1222 = vmatprep.mubr.bf16.mxu0 %v876
      %1223 = vmatmul.mubr.bf16.gmra.mrb[0].mxu0 %v875
      %v1224 = vpop.f32.mrb[0].mxu0
      %v1225 = vadd.f32 %v1064, %v1224
      %v1226 = vpop.f32.mrb[0].mxu0
      %v1227 = vpop.f32.mrb[0].mxu0
      %v1228 = vadd.f32 %v1067, %v1227
      %v1229 = vpop.f32.mrb[0].mxu0
      %1230 = vmatprep.mubr.bf16.mxu0 %v880
      %1231 = vmatmul.mubr.bf16.gmra.mrb[0].mxu0 %v879
      %v1232 = vpop.f32.mrb[0].mxu0
      %v1233 = vadd.f32 %v1072, %v1232
      %v1234 = vpop.f32.mrb[0].mxu0
      %v1235 = vpop.f32.mrb[0].mxu0
      %v1236 = vadd.f32 %v1075, %v1235
      %v1237 = vpop.f32.mrb[0].mxu0
      %1238 = vmatprep.mubr.bf16.mxu0 %v884
      %1239 = vmatmul.mubr.bf16.gmra.mrb[0].mxu0 %v883
      %v1240 = vpop.f32.mrb[0].mxu0
      %v1241 = vadd.f32 %v1080, %v1240
      %v1242 = vpop.f32.mrb[0].mxu0
      %v1243 = vpop.f32.mrb[0].mxu0
      %v1244 = vadd.f32 %v1083, %v1243
      %v1245 = vpop.f32.mrb[0].mxu0
      %1246 = vmatprep.mubr.bf16.mxu0 %v888
      %1247 = vmatmul.mubr.bf16.gmra.mrb[0].mxu0 %v887
      %v1248 = vpop.f32.mrb[0].mxu0
      %v1249 = vadd.f32 %v1088, %v1248
      %v1250 = vpop.f32.mrb[0].mxu0
      %v1251 = vpop.f32.mrb[0].mxu0
      %v1252 = vadd.f32 %v1091, %v1251
      %v1253 = vpop.f32.mrb[0].mxu0
      %1254 = vmatprep.mubr.bf16.mxu0 %v892
      %1255 = vmatmul.mubr.bf16.gmra.mrb[0].mxu0 %v891
      %v1256 = vpop.f32.mrb[0].mxu0
      %v1257 = vadd.f32 %v1096, %v1256
      %v1258 = vpop.f32.mrb[0].mxu0
      %v1259 = vpop.f32.mrb[0].mxu0
      %v1260 = vadd.f32 %v1099, %v1259
      %v1261 = vpop.f32.mrb[0].mxu0
      %1262 = vmatprep.mubr.bf16.mxu0 %v896
      %1263 = vmatmul.mubr.bf16.gmra.mrb[0].mxu0 %v895
      %v1264 = vpop.f32.mrb[0].mxu0
      %v1265 = vadd.f32 %v1104, %v1264
      %v1266 = vpop.f32.mrb[0].mxu0
      %v1267 = vpop.f32.mrb[0].mxu0
      %v1268 = vadd.f32 %v1107, %v1267
      %v1269 = vpop.f32.mrb[0].mxu0
      %1270 = vmatprep.mubr.bf16.mxu0 %v900
      %1271 = vmatmul.mubr.bf16.gmra.mrb[0].mxu0 %v899
      %v1272 = vpop.f32.mrb[0].mxu0
      %v1273 = vadd.f32 %v1112, %v1272
      %v1274 = vpop.f32.mrb[0].mxu0
      %v1275 = vpop.f32.mrb[0].mxu0
      %v1276 = vadd.f32 %v1115, %v1275
      %v1277 = vpop.f32.mrb[0].mxu0
      %1278 = vmatprep.mubr.bf16.mxu0 %v904
      %1279 = vmatmul.mubr.bf16.gmra.mrb[0].mxu0 %v903
      %v1280 = vpop.f32.mrb[0].mxu0
      %v1281 = vadd.f32 %v1120, %v1280
      %v1282 = vpop.f32.mrb[0].mxu0
      %v1283 = vpop.f32.mrb[0].mxu0
      %v1284 = vadd.f32 %v1123, %v1283
      %v1285 = vpop.f32.mrb[0].mxu0
      %1286 = vmatprep.mubr.bf16.mxu0 %v908
      %1287 = vmatmul.mubr.bf16.gmra.mrb[0].mxu0 %v907
      %v1288 = vpop.f32.mrb[0].mxu0
      %v1289 = vadd.f32 %v1128, %v1288
      %v1290 = vpop.f32.mrb[0].mxu0
      %v1291 = vpop.f32.mrb[0].mxu0
      %v1292 = vadd.f32 %v1131, %v1291
      %v1293 = vpop.f32.mrb[0].mxu0
      %1294 = vdwg.mxu0
      %v1295 = vmax.f32 %v1169, 0.0
      %v1296 = vmax.f32 %v1172, 0.0
      %v1297 = vmax.f32 %v1177, 0.0
      %v1298 = vmax.f32 %v1180, 0.0
      %v1299 = vmax.f32 %v1185, 0.0
      %v1300 = vmax.f32 %v1188, 0.0
      %v1301 = vmax.f32 %v1193, 0.0
      %v1302 = vmax.f32 %v1196, 0.0
      %v1303 = vmax.f32 %v1201, 0.0
      %v1304 = vmax.f32 %v1204, 0.0
      %v1305 = vmax.f32 %v1209, 0.0
      %v1306 = vmax.f32 %v1212, 0.0
      %v1307 = vmax.f32 %v1217, 0.0
      %v1308 = vmax.f32 %v1220, 0.0
      %v1309 = vmax.f32 %v1225, 0.0
      %v1310 = vmax.f32 %v1228, 0.0
      %v1311 = vmax.f32 %v1233, 0.0
      %v1312 = vmax.f32 %v1236, 0.0
      %v1313 = vmax.f32 %v1241, 0.0
      %v1314 = vmax.f32 %v1244, 0.0
      %v1315 = vmax.f32 %v1249, 0.0
      %v1316 = vmax.f32 %v1252, 0.0
      %v1317 = vmax.f32 %v1257, 0.0
      %v1318 = vmax.f32 %v1260, 0.0
      %v1319 = vmax.f32 %v1265, 0.0
      %v1320 = vmax.f32 %v1268, 0.0
      %v1321 = vmax.f32 %v1273, 0.0
      %v1322 = vmax.f32 %v1276, 0.0
      %v1323 = vmax.f32 %v1281, 0.0
      %v1324 = vmax.f32 %v1284, 0.0
      %v1325 = vmax.f32 %v1289, 0.0
      %v1326 = vmax.f32 %v1292, 0.0
      %vm1327 = vcmask 130048
      %v1328 = vsel %vm1327, %v1295, 0.0
      %1329 = vadd.xlane.f32.xlu0 %v1328
      %v1330 = vpop.xlane.xlu0 %1329
      %v1331 = vsel %vm1327, %v1296, 0.0
      %1332 = vadd.xlane.f32.xlu0 %v1331
      %v1333 = vpop.xlane.xlu0 %1332
      %v1334 = vsel %vm1327, %v1297, 0.0
      %1335 = vadd.xlane.f32.xlu0 %v1334
      %v1336 = vpop.xlane.xlu0 %1335
      %v1337 = vsel %vm1327, %v1298, 0.0
      %1338 = vadd.xlane.f32.xlu0 %v1337
      %v1339 = vpop.xlane.xlu0 %1338
      %v1340 = vsel %vm1327, %v1299, 0.0
      %1341 = vadd.xlane.f32.xlu0 %v1340
      %v1342 = vpop.xlane.xlu0 %1341
      %v1343 = vsel %vm1327, %v1300, 0.0
      %1344 = vadd.xlane.f32.xlu0 %v1343
      %v1345 = vpop.xlane.xlu0 %1344
      %v1346 = vsel %vm1327, %v1301, 0.0
      %1347 = vadd.xlane.f32.xlu0 %v1346
      %v1348 = vpop.xlane.xlu0 %1347
      %v1349 = vsel %vm1327, %v1302, 0.0
      %1350 = vadd.xlane.f32.xlu0 %v1349
      %v1351 = vpop.xlane.xlu0 %1350
      %v1352 = vsel %vm1327, %v1303, 0.0
      %1353 = vadd.xlane.f32.xlu0 %v1352
      %v1354 = vpop.xlane.xlu0 %1353
      %v1355 = vsel %vm1327, %v1304, 0.0
      %1356 = vadd.xlane.f32.xlu0 %v1355
      %v1357 = vpop.xlane.xlu0 %1356
      %v1358 = vsel %vm1327, %v1305, 0.0
      %1359 = vadd.xlane.f32.xlu0 %v1358
      %v1360 = vpop.xlane.xlu0 %1359
      %v1361 = vsel %vm1327, %v1306, 0.0
      %1362 = vadd.xlane.f32.xlu0 %v1361
      %v1363 = vpop.xlane.xlu0 %1362
      %v1364 = vsel %vm1327, %v1307, 0.0
      %1365 = vadd.xlane.f32.xlu0 %v1364
      %v1366 = vpop.xlane.xlu0 %1365
      %v1367 = vsel %vm1327, %v1308, 0.0
      %1368 = vadd.xlane.f32.xlu0 %v1367
      %v1369 = vpop.xlane.xlu0 %1368
      %v1370 = vsel %vm1327, %v1309, 0.0
      %1371 = vadd.xlane.f32.xlu0 %v1370
      %v1372 = vpop.xlane.xlu0 %1371
      %v1373 = vsel %vm1327, %v1310, 0.0
      %1374 = vadd.xlane.f32.xlu0 %v1373
      %v1375 = vpop.xlane.xlu0 %1374
      %v1376 = vsel %vm1327, %v1311, 0.0
      %1377 = vadd.xlane.f32.xlu0 %v1376
      %v1378 = vpop.xlane.xlu0 %1377
      %v1379 = vsel %vm1327, %v1312, 0.0
      %1380 = vadd.xlane.f32.xlu0 %v1379
      %v1381 = vpop.xlane.xlu0 %1380
      %v1382 = vsel %vm1327, %v1313, 0.0
      %1383 = vadd.xlane.f32.xlu0 %v1382
      %v1384 = vpop.xlane.xlu0 %1383
      %v1385 = vsel %vm1327, %v1314, 0.0
      %1386 = vadd.xlane.f32.xlu0 %v1385
      %v1387 = vpop.xlane.xlu0 %1386
      %v1388 = vsel %vm1327, %v1315, 0.0
      %1389 = vadd.xlane.f32.xlu0 %v1388
      %v1390 = vpop.xlane.xlu0 %1389
      %v1391 = vsel %vm1327, %v1316, 0.0
      %1392 = vadd.xlane.f32.xlu0 %v1391
      %v1393 = vpop.xlane.xlu0 %1392
      %v1394 = vsel %vm1327, %v1317, 0.0
      %1395 = vadd.xlane.f32.xlu0 %v1394
      %v1396 = vpop.xlane.xlu0 %1395
      %v1397 = vsel %vm1327, %v1318, 0.0
      %1398 = vadd.xlane.f32.xlu0 %v1397
      %v1399 = vpop.xlane.xlu0 %1398
      %v1400 = vsel %vm1327, %v1319, 0.0
      %1401 = vadd.xlane.f32.xlu0 %v1400
      %v1402 = vpop.xlane.xlu0 %1401
      %v1403 = vsel %vm1327, %v1320, 0.0
      %1404 = vadd.xlane.f32.xlu0 %v1403
      %v1405 = vpop.xlane.xlu0 %1404
      %v1406 = vsel %vm1327, %v1321, 0.0
      %1407 = vadd.xlane.f32.xlu0 %v1406
      %v1408 = vpop.xlane.xlu0 %1407
      %v1409 = vsel %vm1327, %v1322, 0.0
      %1410 = vadd.xlane.f32.xlu0 %v1409
      %v1411 = vpop.xlane.xlu0 %1410
      %v1412 = vsel %vm1327, %v1323, 0.0
      %1413 = vadd.xlane.f32.xlu0 %v1412
      %v1414 = vpop.xlane.xlu0 %1413
      %v1415 = vsel %vm1327, %v1324, 0.0
      %1416 = vadd.xlane.f32.xlu0 %v1415
      %v1417 = vpop.xlane.xlu0 %1416
      %v1418 = vsel %vm1327, %v1325, 0.0
      %1419 = vadd.xlane.f32.xlu0 %v1418
      %v1420 = vpop.xlane.xlu0 %1419
      %v1421 = vsel %vm1327, %v1326, 0.0
      %1422 = vadd.xlane.f32.xlu0 %v1421
      %v1423 = vpop.xlane.xlu0 %1422
      %p1424 = scmp.eq.s32.totalorder %s23, 0
      // Predicated region
      $region49: #{tpu_custom_call.1} parent=47 // pred_check
        %p1425 = pneg %p1424
      $region50: #{tpu_custom_call.1} parent=47 // pred_check_branch
        %1427 = sbr.rel (%p1425) target = $region52
      $region51: #{tpu_custom_call.1} parent=47 // pred_region
        %vm1428 = vcmask 7168
        %1429 = vst.msk [vmem:[#allocation2] sm:$0xff] %vm1428, %v1330
        %1430 = vst.msk [vmem:[#allocation2 + $0x8] sm:$0xff] %vm1428, %v1333
        %1431 = vst.msk [vmem:[#allocation2 + $0x10] sm:$0xff] %vm1428, %v1336
        %1432 = vst.msk [vmem:[#allocation2 + $0x18] sm:$0xff] %vm1428, %v1339
        %1433 = vst.msk [vmem:[#allocation2 + $0x20] sm:$0xff] %vm1428, %v1342
        %1434 = vst.msk [vmem:[#allocation2 + $0x28] sm:$0xff] %vm1428, %v1345
        %1435 = vst.msk [vmem:[#allocation2 + $0x30] sm:$0xff] %vm1428, %v1348
        %1436 = vst.msk [vmem:[#allocation2 + $0x38] sm:$0xff] %vm1428, %v1351
        %1437 = vst.msk [vmem:[#allocation2 + $0x40] sm:$0xff] %vm1428, %v1354
        %1438 = vst.msk [vmem:[#allocation2 + $0x48] sm:$0xff] %vm1428, %v1357
        %1439 = vst.msk [vmem:[#allocation2 + $0x50] sm:$0xff] %vm1428, %v1360
        %1440 = vst.msk [vmem:[#allocation2 + $0x58] sm:$0xff] %vm1428, %v1363
        %1441 = vst.msk [vmem:[#allocation2 + $0x60] sm:$0xff] %vm1428, %v1366
        %1442 = vst.msk [vmem:[#allocation2 + $0x68] sm:$0xff] %vm1428, %v1369
        %1443 = vst.msk [vmem:[#allocation2 + $0x70] sm:$0xff] %vm1428, %v1372
        %1444 = vst.msk [vmem:[#allocation2 + $0x78] sm:$0xff] %vm1428, %v1375
        %1445 = vst.msk [vmem:[#allocation2 + $0x80] sm:$0xff] %vm1428, %v1378
        %1446 = vst.msk [vmem:[#allocation2 + $0x88] sm:$0xff] %vm1428, %v1381
        %1447 = vst.msk [vmem:[#allocation2 + $0x90] sm:$0xff] %vm1428, %v1384
        %1448 = vst.msk [vmem:[#allocation2 + $0x98] sm:$0xff] %vm1428, %v1387
        %1449 = vst.msk [vmem:[#allocation2 + $0xa0] sm:$0xff] %vm1428, %v1390
        %1450 = vst.msk [vmem:[#allocation2 + $0xa8] sm:$0xff] %vm1428, %v1393
        %1451 = vst.msk [vmem:[#allocation2 + $0xb0] sm:$0xff] %vm1428, %v1396
        %1452 = vst.msk [vmem:[#allocation2 + $0xb8] sm:$0xff] %vm1428, %v1399
        %1453 = vst.msk [vmem:[#allocation2 + $0xc0] sm:$0xff] %vm1428, %v1402
        %1454 = vst.msk [vmem:[#allocation2 + $0xc8] sm:$0xff] %vm1428, %v1405
        %1455 = vst.msk [vmem:[#allocation2 + $0xd0] sm:$0xff] %vm1428, %v1408
        %1456 = vst.msk [vmem:[#allocation2 + $0xd8] sm:$0xff] %vm1428, %v1411
        %1457 = vst.msk [vmem:[#allocation2 + $0xe0] sm:$0xff] %vm1428, %v1414
        %1458 = vst.msk [vmem:[#allocation2 + $0xe8] sm:$0xff] %vm1428, %v1417
        %1459 = vst.msk [vmem:[#allocation2 + $0xf0] sm:$0xff] %vm1428, %v1420
        %1460 = vst.msk [vmem:[#allocation2 + $0xf8] sm:$0xff] %vm1428, %v1423
      $region52: #{tpu_custom_call.1} parent=47 // pred_fallthru
        _
      %p1461 = scmp.ne.s32.totalorder %s23, 0
      // Predicated region
      $region53: #{tpu_custom_call.1} parent=47 // pred_check
        %p1462 = pneg %p1461
      $region54: #{tpu_custom_call.1} parent=47 // pred_check_branch
        %1464 = sbr.rel (%p1462) target = $region56
      $region55: #{tpu_custom_call.1} parent=47 // pred_region
        %v1465 = vld [vmem:[#allocation2] sm:$0xff]
        %v1466 = vld [vmem:[#allocation2 + $0x8] sm:$0xff]
        %v1467 = vld [vmem:[#allocation2 + $0x10] sm:$0xff]
        %v1468 = vld [vmem:[#allocation2 + $0x18] sm:$0xff]
        %v1469 = vld [vmem:[#allocation2 + $0x20] sm:$0xff]
        %v1470 = vld [vmem:[#allocation2 + $0x28] sm:$0xff]
        %v1471 = vld [vmem:[#allocation2 + $0x30] sm:$0xff]
        %v1472 = vld [vmem:[#allocation2 + $0x38] sm:$0xff]
        %v1473 = vld [vmem:[#allocation2 + $0x40] sm:$0xff]
        %v1474 = vld [vmem:[#allocation2 + $0x48] sm:$0xff]
        %v1475 = vld [vmem:[#allocation2 + $0x50] sm:$0xff]
        %v1476 = vld [vmem:[#allocation2 + $0x58] sm:$0xff]
        %v1477 = vld [vmem:[#allocation2 + $0x60] sm:$0xff]
        %v1478 = vld [vmem:[#allocation2 + $0x68] sm:$0xff]
        %v1479 = vld [vmem:[#allocation2 + $0x70] sm:$0xff]
        %v1480 = vld [vmem:[#allocation2 + $0x78] sm:$0xff]
        %v1481 = vld [vmem:[#allocation2 + $0x80] sm:$0xff]
        %v1482 = vld [vmem:[#allocation2 + $0x88] sm:$0xff]
        %v1483 = vld [vmem:[#allocation2 + $0x90] sm:$0xff]
        %v1484 = vld [vmem:[#allocation2 + $0x98] sm:$0xff]
        %v1485 = vld [vmem:[#allocation2 + $0xa0] sm:$0xff]
        %v1486 = vld [vmem:[#allocation2 + $0xa8] sm:$0xff]
        %v1487 = vld [vmem:[#allocation2 + $0xb0] sm:$0xff]
        %v1488 = vld [vmem:[#allocation2 + $0xb8] sm:$0xff]
        %v1489 = vld [vmem:[#allocation2 + $0xc0] sm:$0xff]
        %v1490 = vld [vmem:[#allocation2 + $0xc8] sm:$0xff]
        %v1491 = vld [vmem:[#allocation2 + $0xd0] sm:$0xff]
        %v1492 = vld [vmem:[#allocation2 + $0xd8] sm:$0xff]
        %v1493 = vld [vmem:[#allocation2 + $0xe0] sm:$0xff]
        %v1494 = vld [vmem:[#allocation2 + $0xe8] sm:$0xff]
        %v1495 = vld [vmem:[#allocation2 + $0xf0] sm:$0xff]
        %v1496 = vld [vmem:[#allocation2 + $0xf8] sm:$0xff]
        %v1497 = vadd.f32 %v1465, %v1330
        %v1498 = vadd.f32 %v1466, %v1333
        %v1499 = vadd.f32 %v1467, %v1336
        %v1500 = vadd.f32 %v1468, %v1339
        %v1501 = vadd.f32 %v1469, %v1342
        %v1502 = vadd.f32 %v1470, %v1345
        %v1503 = vadd.f32 %v1471, %v1348
        %v1504 = vadd.f32 %v1472, %v1351
        %v1505 = vadd.f32 %v1473, %v1354
        %v1506 = vadd.f32 %v1474, %v1357
        %v1507 = vadd.f32 %v1475, %v1360
        %v1508 = vadd.f32 %v1476, %v1363
        %v1509 = vadd.f32 %v1477, %v1366
        %v1510 = vadd.f32 %v1478, %v1369
        %v1511 = vadd.f32 %v1479, %v1372
        %v1512 = vadd.f32 %v1480, %v1375
        %v1513 = vadd.f32 %v1481, %v1378
        %v1514 = vadd.f32 %v1482, %v1381
        %v1515 = vadd.f32 %v1483, %v1384
        %v1516 = vadd.f32 %v1484, %v1387
        %v1517 = vadd.f32 %v1485, %v1390
        %v1518 = vadd.f32 %v1486, %v1393
        %v1519 = vadd.f32 %v1487, %v1396
        %v1520 = vadd.f32 %v1488, %v1399
        %v1521 = vadd.f32 %v1489, %v1402
        %v1522 = vadd.f32 %v1490, %v1405
        %v1523 = vadd.f32 %v1491, %v1408
        %v1524 = vadd.f32 %v1492, %v1411
        %v1525 = vadd.f32 %v1493, %v1414
        %v1526 = vadd.f32 %v1494, %v1417
        %v1527 = vadd.f32 %v1495, %v1420
        %v1528 = vadd.f32 %v1496, %v1423
        %vm1529 = vcmask 7168
        %1530 = vst.msk [vmem:[#allocation2] sm:$0xff] %vm1529, %v1497
        %1531 = vst.msk [vmem:[#allocation2 + $0x8] sm:$0xff] %vm1529, %v1498
        %1532 = vst.msk [vmem:[#allocation2 + $0x10] sm:$0xff] %vm1529, %v1499
        %1533 = vst.msk [vmem:[#allocation2 + $0x18] sm:$0xff] %vm1529, %v1500
        %1534 = vst.msk [vmem:[#allocation2 + $0x20] sm:$0xff] %vm1529, %v1501
        %1535 = vst.msk [vmem:[#allocation2 + $0x28] sm:$0xff] %vm1529, %v1502
        %1536 = vst.msk [vmem:[#allocation2 + $0x30] sm:$0xff] %vm1529, %v1503
        %1537 = vst.msk [vmem:[#allocation2 + $0x38] sm:$0xff] %vm1529, %v1504
        %1538 = vst.msk [vmem:[#allocation2 + $0x40] sm:$0xff] %vm1529, %v1505
        %1539 = vst.msk [vmem:[#allocation2 + $0x48] sm:$0xff] %vm1529, %v1506
        %1540 = vst.msk [vmem:[#allocation2 + $0x50] sm:$0xff] %vm1529, %v1507
        %1541 = vst.msk [vmem:[#allocation2 + $0x58] sm:$0xff] %vm1529, %v1508
        %1542 = vst.msk [vmem:[#allocation2 + $0x60] sm:$0xff] %vm1529, %v1509
        %1543 = vst.msk [vmem:[#allocation2 + $0x68] sm:$0xff] %vm1529, %v1510
        %1544 = vst.msk [vmem:[#allocation2 + $0x70] sm:$0xff] %vm1529, %v1511
        %1545 = vst.msk [vmem:[#allocation2 + $0x78] sm:$0xff] %vm1529, %v1512
        %1546 = vst.msk [vmem:[#allocation2 + $0x80] sm:$0xff] %vm1529, %v1513
        %1547 = vst.msk [vmem:[#allocation2 + $0x88] sm:$0xff] %vm1529, %v1514
        %1548 = vst.msk [vmem:[#allocation2 + $0x90] sm:$0xff] %vm1529, %v1515
        %1549 = vst.msk [vmem:[#allocation2 + $0x98] sm:$0xff] %vm1529, %v1516
        %1550 = vst.msk [vmem:[#allocation2 + $0xa0] sm:$0xff] %vm1529, %v1517
        %1551 = vst.msk [vmem:[#allocation2 + $0xa8] sm:$0xff] %vm1529, %v1518
        %1552 = vst.msk [vmem:[#allocation2 + $0xb0] sm:$0xff] %vm1529, %v1519
        %1553 = vst.msk [vmem:[#allocation2 + $0xb8] sm:$0xff] %vm1529, %v1520
        %1554 = vst.msk [vmem:[#allocation2 + $0xc0] sm:$0xff] %vm1529, %v1521
        %1555 = vst.msk [vmem:[#allocation2 + $0xc8] sm:$0xff] %vm1529, %v1522
        %1556 = vst.msk [vmem:[#allocation2 + $0xd0] sm:$0xff] %vm1529, %v1523
        %1557 = vst.msk [vmem:[#allocation2 + $0xd8] sm:$0xff] %vm1529, %v1524
        %1558 = vst.msk [vmem:[#allocation2 + $0xe0] sm:$0xff] %vm1529, %v1525
        %1559 = vst.msk [vmem:[#allocation2 + $0xe8] sm:$0xff] %vm1529, %v1526
        %1560 = vst.msk [vmem:[#allocation2 + $0xf0] sm:$0xff] %vm1529, %v1527
        %1561 = vst.msk [vmem:[#allocation2 + $0xf8] sm:$0xff] %vm1529, %v1528
      $region56: #{tpu_custom_call.1} parent=47 // pred_fallthru
        _
      // Predicated region
      $region57: #{tpu_custom_call.1} parent=47 // pred_check
        %p1562 = pneg %p1424
      $region58: #{tpu_custom_call.1} parent=47 // pred_check_branch
        %1564 = sbr.rel (%p1562) target = $region60
      $region59: #{tpu_custom_call.1} parent=47 // pred_region
        %v1565 = vld [vmem:[#allocation2] sm:$0xff]
        %v1566 = vld [vmem:[#allocation2 + $0x8] sm:$0xff]
        %v1567 = vld [vmem:[#allocation2 + $0x10] sm:$0xff]
        %v1568 = vld [vmem:[#allocation2 + $0x18] sm:$0xff]
        %v1569 = vld [vmem:[#allocation2 + $0x20] sm:$0xff]
        %v1570 = vld [vmem:[#allocation2 + $0x28] sm:$0xff]
        %v1571 = vld [vmem:[#allocation2 + $0x30] sm:$0xff]
        %v1572 = vld [vmem:[#allocation2 + $0x38] sm:$0xff]
        %v1573 = vld [vmem:[#allocation2 + $0x40] sm:$0xff]
        %v1574 = vld [vmem:[#allocation2 + $0x48] sm:$0xff]
        %v1575 = vld [vmem:[#allocation2 + $0x50] sm:$0xff]
        %v1576 = vld [vmem:[#allocation2 + $0x58] sm:$0xff]
        %v1577 = vld [vmem:[#allocation2 + $0x60] sm:$0xff]
        %v1578 = vld [vmem:[#allocation2 + $0x68] sm:$0xff]
        %v1579 = vld [vmem:[#allocation2 + $0x70] sm:$0xff]
        %v1580 = vld [vmem:[#allocation2 + $0x78] sm:$0xff]
        %v1581 = vld [vmem:[#allocation2 + $0x80] sm:$0xff]
        %v1582 = vld [vmem:[#allocation2 + $0x88] sm:$0xff]
        %v1583 = vld [vmem:[#allocation2 + $0x90] sm:$0xff]
        %v1584 = vld [vmem:[#allocation2 + $0x98] sm:$0xff]
        %v1585 = vld [vmem:[#allocation2 + $0xa0] sm:$0xff]
        %v1586 = vld [vmem:[#allocation2 + $0xa8] sm:$0xff]
        %v1587 = vld [vmem:[#allocation2 + $0xb0] sm:$0xff]
        %v1588 = vld [vmem:[#allocation2 + $0xb8] sm:$0xff]
        %v1589 = vld [vmem:[#allocation2 + $0xc0] sm:$0xff]
        %v1590 = vld [vmem:[#allocation2 + $0xc8] sm:$0xff]
        %v1591 = vld [vmem:[#allocation2 + $0xd0] sm:$0xff]
        %v1592 = vld [vmem:[#allocation2 + $0xd8] sm:$0xff]
        %v1593 = vld [vmem:[#allocation2 + $0xe0] sm:$0xff]
        %v1594 = vld [vmem:[#allocation2 + $0xe8] sm:$0xff]
        %v1595 = vld [vmem:[#allocation2 + $0xf0] sm:$0xff]
        %v1596 = vld [vmem:[#allocation2 + $0xf8] sm:$0xff]
        %v1597 = vmul.f32 %v1565, 0.0625
        %v1598 = vmul.f32 %v1566, 0.0625
        %v1599 = vmul.f32 %v1567, 0.0625
        %v1600 = vmul.f32 %v1568, 0.0625
        %v1601 = vmul.f32 %v1569, 0.0625
        %v1602 = vmul.f32 %v1570, 0.0625
        %v1603 = vmul.f32 %v1571, 0.0625
        %v1604 = vmul.f32 %v1572, 0.0625
        %v1605 = vmul.f32 %v1573, 0.0625
        %v1606 = vmul.f32 %v1574, 0.0625
        %v1607 = vmul.f32 %v1575, 0.0625
        %v1608 = vmul.f32 %v1576, 0.0625
        %v1609 = vmul.f32 %v1577, 0.0625
        %v1610 = vmul.f32 %v1578, 0.0625
        %v1611 = vmul.f32 %v1579, 0.0625
        %v1612 = vmul.f32 %v1580, 0.0625
        %v1613 = vmul.f32 %v1581, 0.0625
        %v1614 = vmul.f32 %v1582, 0.0625
        %v1615 = vmul.f32 %v1583, 0.0625
        %v1616 = vmul.f32 %v1584, 0.0625
        %v1617 = vmul.f32 %v1585, 0.0625
        %v1618 = vmul.f32 %v1586, 0.0625
        %v1619 = vmul.f32 %v1587, 0.0625
        %v1620 = vmul.f32 %v1588, 0.0625
        %v1621 = vmul.f32 %v1589, 0.0625
        %v1622 = vmul.f32 %v1590, 0.0625
        %v1623 = vmul.f32 %v1591, 0.0625
        %v1624 = vmul.f32 %v1592, 0.0625
        %v1625 = vmul.f32 %v1593, 0.0625
        %v1626 = vmul.f32 %v1594, 0.0625
        %v1627 = vmul.f32 %v1595, 0.0625
        %v1628 = vmul.f32 %v1596, 0.0625
        %v1629 = vld [vmem:[%s3] sm:$0xff]
        %v1630 = vld [vmem:[%s3 + $0x8] sm:$0xff]
        %v1631 = vld [vmem:[%s3 + $0x10] sm:$0xff]
        %v1632 = vld [vmem:[%s3 + $0x18] sm:$0xff]
        %v1633 = vld [vmem:[%s3 + $0x20] sm:$0xff]
        %v1634 = vld [vmem:[%s3 + $0x28] sm:$0xff]
        %v1635 = vld [vmem:[%s3 + $0x30] sm:$0xff]
        %v1636 = vld [vmem:[%s3 + $0x38] sm:$0xff]
        %v1637 = vld [vmem:[%s3 + $0x40] sm:$0xff]
        %v1638 = vld [vmem:[%s3 + $0x48] sm:$0xff]
        %v1639 = vld [vmem:[%s3 + $0x50] sm:$0xff]
        %v1640 = vld [vmem:[%s3 + $0x58] sm:$0xff]
        %v1641 = vld [vmem:[%s3 + $0x60] sm:$0xff]
        %v1642 = vld [vmem:[%s3 + $0x68] sm:$0xff]
        %v1643 = vld [vmem:[%s3 + $0x70] sm:$0xff]
        %v1644 = vld [vmem:[%s3 + $0x78] sm:$0xff]
        %v1645 = vld [vmem:[%s4] sm:$0xff]
        %v1646 = vld [vmem:[%s4 + $0x8] sm:$0xff]
        %v1647 = vld [vmem:[%s4 + $0x10] sm:$0xff]
        %v1648 = vld [vmem:[%s4 + $0x18] sm:$0xff]
        %v1649 = vld [vmem:[%s4 + $0x20] sm:$0xff]
        %v1650 = vld [vmem:[%s4 + $0x28] sm:$0xff]
        %v1651 = vld [vmem:[%s4 + $0x30] sm:$0xff]
        %v1652 = vld [vmem:[%s4 + $0x38] sm:$0xff]
        %1653 = vmatprep.subr.mxu0 0.0
        %1654 = vmatpush1.msra.mxu0 %v1597
        %1655 = vmatprep.subr.mxu0 0.0
        %1656 = vmatpush1.msra.mxu0 %v1598
        %1657 = vmatprep.subr.mxu0 0.0
        %1658 = vmatpush1.msra.mxu0 %v1599
        %1659 = vmatprep.subr.mxu0 0.0
        %1660 = vmatpush1.msra.mxu0 %v1600
        %1661 = vmatprep.subr.mxu0 0.0
        %1662 = vmatpush1.msra.mxu0 %v1601
        %1663 = vmatprep.subr.mxu0 0.0
        %1664 = vmatpush1.msra.mxu0 %v1602
        %1665 = vmatprep.subr.mxu0 0.0
        %1666 = vmatpush1.msra.mxu0 %v1603
        %1667 = vmatprep.subr.mxu0 0.0
        %1668 = vmatpush1.msra.mxu0 %v1604
        %1669 = vmatprep.subr.mxu0 0.0
        %1670 = vmatpush1.msra.mxu0 %v1605
        %1671 = vmatprep.subr.mxu0 0.0
        %1672 = vmatpush1.msra.mxu0 %v1606
        %1673 = vmatprep.subr.mxu0 0.0
        %1674 = vmatpush1.msra.mxu0 %v1607
        %1675 = vmatprep.subr.mxu0 0.0
        %1676 = vmatpush1.msra.mxu0 %v1608
        %1677 = vmatprep.subr.mxu0 0.0
        %1678 = vmatpush1.msra.mxu0 %v1609
        %1679 = vmatprep.subr.mxu0 0.0
        %1680 = vmatpush1.msra.mxu0 %v1610
        %1681 = vmatprep.subr.mxu0 0.0
        %1682 = vmatpush1.msra.mxu0 %v1611
        %1683 = vmatprep.subr.mxu0 0.0
        %1684 = vmatpush1.msra.mxu0 %v1612
        %1685 = vmatprep.subr.mxu0 0.0
        %1686 = vmatpush1.msra.mxu0 %v1613
        %1687 = vmatprep.subr.mxu0 0.0
        %1688 = vmatpush1.msra.mxu0 %v1614
        %1689 = vmatprep.subr.mxu0 0.0
        %1690 = vmatpush1.msra.mxu0 %v1615
        %1691 = vmatprep.subr.mxu0 0.0
        %1692 = vmatpush1.msra.mxu0 %v1616
        %1693 = vmatprep.subr.mxu0 0.0
        %1694 = vmatpush1.msra.mxu0 %v1617
        %1695 = vmatprep.subr.mxu0 0.0
        %1696 = vmatpush1.msra.mxu0 %v1618
        %1697 = vmatprep.subr.mxu0 0.0
        %1698 = vmatpush1.msra.mxu0 %v1619
        %1699 = vmatprep.subr.mxu0 0.0
        %1700 = vmatpush1.msra.mxu0 %v1620
        %1701 = vmatprep.subr.mxu0 0.0
        %1702 = vmatpush1.msra.mxu0 %v1621
        %1703 = vmatprep.subr.mxu0 0.0
        %1704 = vmatpush1.msra.mxu0 %v1622
        %1705 = vmatprep.subr.mxu0 0.0
        %1706 = vmatpush1.msra.mxu0 %v1623
        %1707 = vmatprep.subr.mxu0 0.0
        %1708 = vmatpush1.msra.mxu0 %v1624
        %1709 = vmatprep.subr.mxu0 0.0
        %1710 = vmatpush1.msra.mxu0 %v1625
        %1711 = vmatprep.subr.mxu0 0.0
        %1712 = vmatpush1.msra.mxu0 %v1626
        %1713 = vmatprep.subr.mxu0 0.0
        %1714 = vmatpush1.msra.mxu0 %v1627
        %1715 = vmatprep.subr.mxu0 0.0
        %1716 = vmatpush1.msra.mxu0 %v1628
        %1717 = vmatprep.mubr.f32.mxu0 %v1630
        %1718 = vmatmul.mubr.f32.gmra.mrb[0].mxu0 %v1629
        %v1719 = vpop.f32.mrb[0].mxu0
        %v1720 = vadd.f32 %v1645, %v1719
        %v1721 = vpop.f32.mrb[0].mxu0
        %1722 = vmatprep.mubr.f32.mxu0 %v1632
        %1723 = vmatmul.mubr.f32.gmra.mrb[0].mxu0 %v1631
        %v1724 = vpop.f32.mrb[0].mxu0
        %v1725 = vadd.f32 %v1646, %v1724
        %v1726 = vpop.f32.mrb[0].mxu0
        %1727 = vmatprep.mubr.f32.mxu0 %v1634
        %1728 = vmatmul.mubr.f32.gmra.mrb[0].mxu0 %v1633
        %v1729 = vpop.f32.mrb[0].mxu0
        %v1730 = vadd.f32 %v1647, %v1729
        %v1731 = vpop.f32.mrb[0].mxu0
        %1732 = vmatprep.mubr.f32.mxu0 %v1636
        %1733 = vmatmul.mubr.f32.gmra.mrb[0].mxu0 %v1635
        %v1734 = vpop.f32.mrb[0].mxu0
        %v1735 = vadd.f32 %v1648, %v1734
        %v1736 = vpop.f32.mrb[0].mxu0
        %1737 = vmatprep.mubr.f32.mxu0 %v1638
        %1738 = vmatmul.mubr.f32.gmra.mrb[0].mxu0 %v1637
        %v1739 = vpop.f32.mrb[0].mxu0
        %v1740 = vadd.f32 %v1649, %v1739
        %v1741 = vpop.f32.mrb[0].mxu0
        %1742 = vmatprep.mubr.f32.mxu0 %v1640
        %1743 = vmatmul.mubr.f32.gmra.mrb[0].mxu0 %v1639
        %v1744 = vpop.f32.mrb[0].mxu0
        %v1745 = vadd.f32 %v1650, %v1744
        %v1746 = vpop.f32.mrb[0].mxu0
        %1747 = vmatprep.mubr.f32.mxu0 %v1642
        %1748 = vmatmul.mubr.f32.gmra.mrb[0].mxu0 %v1641
        %v1749 = vpop.f32.mrb[0].mxu0
        %v1750 = vadd.f32 %v1651, %v1749
        %v1751 = vpop.f32.mrb[0].mxu0
        %1752 = vmatprep.mubr.f32.mxu0 %v1644
        %1753 = vmatmul.mubr.f32.gmra.mrb[0].mxu0 %v1643
        %v1754 = vpop.f32.mrb[0].mxu0
        %v1755 = vadd.f32 %v1652, %v1754
        %v1756 = vpop.f32.mrb[0].mxu0
        %1757 = vdwg.mxu0
        %v1758 = vmax.f32 %v1720, 0.0
        %v1759 = vmax.f32 %v1725, 0.0
        %v1760 = vmax.f32 %v1730, 0.0
        %v1761 = vmax.f32 %v1735, 0.0
        %v1762 = vmax.f32 %v1740, 0.0
        %v1763 = vmax.f32 %v1745, 0.0
        %v1764 = vmax.f32 %v1750, 0.0
        %v1765 = vmax.f32 %v1755, 0.0
        %v1766 = vld [vmem:[%s5] sm:$0x3f]
        %v1767 = vld [vmem:[%s6] sm:$0x3f]
        %vm1768 = vcmask 523264
        %v1770 = vsel %vm1768, %v1766, 0
        %1772 = vmatprep.subr.mxu0 0.0
        %1773 = vmatpush1.msra.mxu0 %v1758
        %1774 = vmatprep.subr.mxu0 0.0
        %1775 = vmatpush1.msra.mxu0 %v1759
        %1776 = vmatprep.subr.mxu0 0.0
        %1777 = vmatpush1.msra.mxu0 %v1760
        %1778 = vmatprep.subr.mxu0 0.0
        %1779 = vmatpush1.msra.mxu0 %v1761
        %1780 = vmatprep.subr.mxu0 0.0
        %1781 = vmatpush1.msra.mxu0 %v1762
        %1782 = vmatprep.subr.mxu0 0.0
        %1783 = vmatpush1.msra.mxu0 %v1763
        %1784 = vmatprep.subr.mxu0 0.0
        %1785 = vmatpush1.msra.mxu0 %v1764
        %1786 = vmatprep.subr.mxu0 0.0
        %1787 = vmatpush1.msra.mxu0 %v1765
        %1788 = vmatprep.subr.mxu0 0.0
        %1789 = vmatpush1.msra.mxu0 0.0
        %1790 = vmatprep.subr.mxu0 0.0
        %1791 = vmatpush1.msra.mxu0 0.0
        %1792 = vmatprep.subr.mxu0 0.0
        %1793 = vmatpush1.msra.mxu0 0.0
        %1794 = vmatprep.subr.mxu0 0.0
        %1795 = vmatpush1.msra.mxu0 0.0
        %1796 = vmatprep.subr.mxu0 0.0
        %1797 = vmatpush1.msra.mxu0 0.0
        %1798 = vmatprep.subr.mxu0 0.0
        %1799 = vmatpush1.msra.mxu0 0.0
        %1800 = vmatprep.subr.mxu0 0.0
        %1801 = vmatpush1.msra.mxu0 0.0
        %1802 = vmatprep.subr.mxu0 0.0
        %1803 = vmatpush1.msra.mxu0 0.0
        %1804 = vmatprep.subr.mxu0 0.0
        %1805 = vmatpush1.msra.mxu0 0.0
        %1806 = vmatprep.subr.mxu0 0.0
        %1807 = vmatpush1.msra.mxu0 0.0
        %1808 = vmatprep.subr.mxu0 0.0
        %1809 = vmatpush1.msra.mxu0 0.0
        %1810 = vmatprep.subr.mxu0 0.0
        %1811 = vmatpush1.msra.mxu0 0.0
        %1812 = vmatprep.subr.mxu0 0.0
        %1813 = vmatpush1.msra.mxu0 0.0
        %1814 = vmatprep.subr.mxu0 0.0
        %1815 = vmatpush1.msra.mxu0 0.0
        %1816 = vmatprep.subr.mxu0 0.0
        %1817 = vmatpush1.msra.mxu0 0.0
        %1818 = vmatprep.subr.mxu0 0.0
        %1819 = vmatpush1.msra.mxu0 0.0
        %1820 = vmatprep.subr.mxu0 0.0
        %1821 = vmatpush1.msra.mxu0 0.0
        %1822 = vmatprep.subr.mxu0 0.0
        %1823 = vmatpush1.msra.mxu0 0.0
        %1824 = vmatprep.subr.mxu0 0.0
        %1825 = vmatpush1.msra.mxu0 0.0
        %1826 = vmatprep.subr.mxu0 0.0
        %1827 = vmatpush1.msra.mxu0 0.0
        %1828 = vmatprep.subr.mxu0 0.0
        %1829 = vmatpush1.msra.mxu0 0.0
        %1830 = vmatprep.subr.mxu0 0.0
        %1831 = vmatpush1.msra.mxu0 0.0
        %1832 = vmatprep.subr.mxu0 0.0
        %1833 = vmatpush1.msra.mxu0 0.0
        %1834 = vmatprep.subr.mxu0 0.0
        %1835 = vmatpush1.msra.mxu0 0.0
        %1836 = vmatprep.mubr.f32.mxu0 0.0
        %1837 = vmatmul.mubr.f32.gmra.mrb[0].mxu0 %v1770
        %v1838 = vpop.f32.mrb[0].mxu0
        %v1839 = vadd.f32 %v1767, %v1838
        %v1840 = vpop.f32.mrb[0].mxu0
        %1841 = vdwg.mxu0
        %vm1842 = vcmask 5120
        %1843 = vst.msk [vmem:[%s299] sm:$0x3f] %vm1842, %v1839
      $region60: #{tpu_custom_call.1} parent=47 // pred_fallthru
        _
      %p1844 = scmp.lt.s32.totalorder %s22, 1
      %s1845 = scalar_select %p1844, %s22, 1
      %s1846 = smul.addr %s1845, 8
      %s1847 = scalar_lea.vmem %s7, %s1846
      // Predicated region
      $region61: #{tpu_custom_call.1} parent=47 // pred_check
        %p1848 = pneg %p202
      $region62: #{tpu_custom_call.1} parent=47 // pred_check_branch
        %1850 = sbr.rel (%p1848) target = $region64
      $region63: #{tpu_custom_call.1} parent=47 // pred_region
        _
      $region64: #{tpu_custom_call.1} parent=47 // pred_fallthru
        _
    $region48: #{tpu_custom_call.1} parent=5 // pred_fallthru
      _
    %p1851 = scmp.le.s32.totalorder 2, %s13
    // Predicated region
    $region65: #{tpu_custom_call.1} parent=5 // pred_check
      %p1852 = pneg %p1851
    $region66: #{tpu_custom_call.1} parent=5 // pred_check_branch
      %1854 = sbr.rel (%p1852) target = $region68
    $region67: #{tpu_custom_call.1} parent=5 // pred_region
      %s1855 = ssub.s32 %s13, 2
      // Predicated region
      $region69: #{tpu_custom_call.1} parent=67 // pred_check
        %p1856 = pneg %p208
      $region70: #{tpu_custom_call.1} parent=67 // pred_check_branch
        %1858 = sbr.rel (%p1856) target = $region72
      $region71: #{tpu_custom_call.1} parent=67 // pred_region
        %p1859 = scmp.lt.s32.totalorder %s24, 1
        %s1860 = scalar_select %p1859, %s24, 1
        %s1861 = smul.addr %s1860, 8
        %s1862 = scalar_lea.vmem %s7, %s1861
      $region72: #{tpu_custom_call.1} parent=67 // pred_fallthru
        _
    $region68: #{tpu_custom_call.1} parent=5 // pred_fallthru
      _
  $region6: #{tpu_custom_call.1} parent=0 // loop_footer
    %s17 = sadd.s32 1, %s13
  $region7: #{tpu_custom_call.1} parent=0 // loop_footer_branch
    %12 = sbr.rel target = $region3
  $region8: #{tpu_custom_call.1} parent=0 // loop_exit
    _

</llo_original>
